<compile_context>
chip_gen: v6e
topology: v6e:2x2x1
jax: 0.10.0
libtpu: 0.0.40
codegen_flags: <defaults>
</compile_context>

<pallas_src>
import jax
import jax.numpy as jnp
from jax.experimental import pallas as pl
from jax.experimental.pallas import tpu as pltpu


HP = 128          # padded hidden size (lane tile)
KP = 2 * HP       # fused LHS depth: [x_t | 1 | pad] (128) + h (128)
GP = 4 * HP       # fused gate width (i, f, g, o)
P = 128           # padded FC width / output slab width


# ----------------------------- Pallas kernel -------------------------------


def lstm_mlp_kernel(
    xs_ref,        # (T, Bp, 128)  per-step LHS top half: [x_t | 1 | zeros]
    w_lstm_ref,    # (256, 512)    rows 0..10: W_ih, row 11: b_ih+b_hh,
                   #               rows 128..227: W_hh, all other rows zero
    w_fc_ref,      # (384, 128)    rows [0:128)=w1, [128:256)=w2, [256:384)=w3
    b_fc_ref,      # (8, 128)      row 0 = b1, row 1 = b2, row 2 = b3
    out_ref,       # (Bp, 128)     lane-dense output slab
):
    T = xs_ref.shape[0]
    Bp = out_ref.shape[0]
    Hp = HP

    def sigmoid(v):
        # Exact: sigmoid(x) = 0.5*tanh(0.5*x) + 0.5 -> one EUP op per gate.
        return 0.5 * jnp.tanh(0.5 * v) + 0.5

    h0 = jnp.zeros((Bp, Hp), jnp.float32)
    c0 = jnp.zeros((Bp, Hp), jnp.float32)

    def step(t, carry):
        h, c = carry
        # Fused LHS: first 128 lanes = [x_t | 1 | 0...] (precomputed in the
        # wrapper), last 128 lanes = h. One (Bp,256)@(256,512) matmul gives
        # x_t@W_ih + b + h@W_hh for all four gates.
        lhs = jnp.concatenate([xs_ref[t], h], axis=1)            # (Bp, 256)
        pre = jnp.dot(lhs, w_lstm_ref[...],
                      preferred_element_type=jnp.float32)        # (Bp, 512)
        i_g = sigmoid(pre[:, 0 * Hp:1 * Hp])
        f_g = sigmoid(pre[:, 1 * Hp:2 * Hp])
        g_g = jnp.tanh(pre[:, 2 * Hp:3 * Hp])
        o_g = sigmoid(pre[:, 3 * Hp:4 * Hp])
        c_new = f_g * c + i_g * g_g
        h_new = o_g * jnp.tanh(c_new)
        return (h_new, c_new)

    # TODO(synk): stage the (256,512) RHS in the MXU once for the whole
    # recurrence via pltpu.matmul_push_rhs / matmul_acc_lhs / matmul_pop to
    # avoid re-streaming weights every step; kept as jnp.dot for portability.
    h_last, _ = jax.lax.fori_loop(0, T, step, (h0, c0), unroll=True)

    # --- MLP head on the last hidden state (padded lanes stay zero). ---
    z1 = jnp.maximum(
        jnp.dot(h_last, w_fc_ref[0:P, :], preferred_element_type=jnp.float32)
        + b_fc_ref[0:1, :], 0.0)
    z2 = jnp.maximum(
        jnp.dot(z1, w_fc_ref[P:2 * P, :], preferred_element_type=jnp.float32)
        + b_fc_ref[1:2, :], 0.0)
    out_ref[...] = (
        jnp.dot(z2, w_fc_ref[2 * P:3 * P, :],
                preferred_element_type=jnp.float32)
        + b_fc_ref[2:3, :])


# ------------------------------- Wrapper ------------------------------------


@jax.jit
def lstm_model_forward(x, kp):
    """x: (B, T, 11) float32 -> (B, 1) float32. kp: packed/padded params."""
    B, T, F = x.shape
    Bp = max(8, ((B + 7) // 8) * 8)

    # Build the per-step LHS top half once: time-major, batch padded to a
    # sublane multiple, features in lanes [0, F), constant 1 in lane F (bias
    # enable), zeros elsewhere.
    x_tm = jnp.transpose(x, (1, 0, 2))                           # (T, B, F)
    x_tm = jnp.pad(x_tm, ((0, 0), (0, Bp - B), (0, 0)))          # (T, Bp, F)
    ones = jnp.ones((T, Bp, 1), jnp.float32)
    x_top = jnp.concatenate([x_tm, ones], axis=-1)               # (T, Bp, F+1)
    x_top = jnp.pad(x_top, ((0, 0), (0, 0), (0, HP - (F + 1))))  # (T, Bp, 128)

    vmem = pl.BlockSpec(memory_space=pltpu.MemorySpace.VMEM)
    out = pl.pallas_call(
        lstm_mlp_kernel,
        out_shape=jax.ShapeDtypeStruct((Bp, P), jnp.float32),
        in_specs=[vmem, vmem, vmem, vmem],
        out_specs=vmem,
    )(x_top, kp["w_lstm"], kp["w_fc"], kp["b_fc"])
    return out[:B, :1]


# ------------------------- Parameter preparation -----------------------------


def init_params(key, input_size=11, hidden=100):
    """Deterministic synthetic parameters, PyTorch-style uniform init.

    Weights are stored transposed (in_features, out_features); LSTM gate
    weights/biases are kept per-gate (i, f, g, o) in logical (unpadded) form.
    """
    ks = jax.random.split(key, 22)
    k_lstm = 1.0 / jnp.sqrt(hidden)

    def u(k, shape, bound):
        return jax.random.uniform(k, shape, jnp.float32, -bound, bound)

    p = {}
    p["wii"] = u(ks[0], (input_size, hidden), k_lstm)
    p["wif"] = u(ks[1], (input_size, hidden), k_lstm)
    p["wig"] = u(ks[2], (input_size, hidden), k_lstm)
    p["wio"] = u(ks[3], (input_size, hidden), k_lstm)
    p["whi"] = u(ks[4], (hidden, hidden), k_lstm)
    p["whf"] = u(ks[5], (hidden, hidden), k_lstm)
    p["whg"] = u(ks[6], (hidden, hidden), k_lstm)
    p["who"] = u(ks[7], (hidden, hidden), k_lstm)
    # Combined b_ih + b_hh per gate, kept 2-D for clean packing.
    p["bi"] = u(ks[8], (1, hidden), k_lstm) + u(ks[9], (1, hidden), k_lstm)
    p["bf"] = u(ks[10], (1, hidden), k_lstm) + u(ks[11], (1, hidden), k_lstm)
    p["bg"] = u(ks[12], (1, hidden), k_lstm) + u(ks[13], (1, hidden), k_lstm)
    p["bo"] = u(ks[14], (1, hidden), k_lstm) + u(ks[15], (1, hidden), k_lstm)

    # FC head (weights transposed: (in, out)).
    p["w1"] = u(ks[16], (hidden, 50), 1.0 / jnp.sqrt(hidden))
    p["b1"] = u(ks[17], (1, 50), 1.0 / jnp.sqrt(hidden))
    p["w2"] = u(ks[18], (50, 25), 1.0 / jnp.sqrt(50.0))
    p["b2"] = u(ks[19], (1, 25), 1.0 / jnp.sqrt(50.0))
    p["w3"] = u(ks[20], (25, 1), 1.0 / jnp.sqrt(25.0))
    p["b3"] = u(ks[21], (1, 1), 1.0 / jnp.sqrt(25.0))
    return p


def pack_params(p):
    """Fuse gates + bias + input/hidden weights into tile-aligned slabs.

    All padded rows/lanes are exactly zero (the kernel's correctness relies
    on this invariant -- see module docstring).
    """
    F = p["wii"].shape[0]          # 11
    H = p["whi"].shape[0]          # 100

    # Stacked LSTM weights: rows [0,F) = W_ih, row F = b_ih+b_hh,
    # rows [HP, HP+H) = W_hh; per-gate 128-lane column blocks (i, f, g, o).
    w_lstm = jnp.zeros((KP, GP), jnp.float32)
    gates = [
        (p["wii"], p["whi"], p["bi"]),
        (p["wif"], p["whf"], p["bf"]),
        (p["wig"], p["whg"], p["bg"]),
        (p["wio"], p["who"], p["bo"]),
    ]
    for g, (wih, whh, b) in enumerate(gates):
        col = g * HP
        w_lstm = w_lstm.at[0:F, col:col + H].set(wih)
        w_lstm = w_lstm.at[F, col:col + H].set(b[0])
        w_lstm = w_lstm.at[HP:HP + H, col:col + H].set(whh)

    # FC weights stacked into one (384, 128) slab; biases into one (8, 128).
    w_fc = jnp.zeros((3 * P, P), jnp.float32)
    w_fc = w_fc.at[0:H, 0:50].set(p["w1"])
    w_fc = w_fc.at[P:P + 50, 0:25].set(p["w2"])
    w_fc = w_fc.at[2 * P:2 * P + 25, 0:1].set(p["w3"])

    b_fc = jnp.zeros((8, P), jnp.float32)
    b_fc = b_fc.at[0, 0:50].set(p["b1"][0])
    b_fc = b_fc.at[1, 0:25].set(p["b2"][0])
    b_fc = b_fc.at[2, 0:1].set(p["b3"][0])

    return {"w_lstm": w_lstm, "w_fc": w_fc, "b_fc": b_fc}


# ------------------------- Pure-JAX reference check --------------------------


def reference_forward(x, p):
    B, T, _ = x.shape
    H = p["whi"].shape[0]
    h = jnp.zeros((B, H), jnp.float32)
    c = jnp.zeros((B, H), jnp.float32)
    for t in range(T):
        xt = x[:, t, :]
        i = jax.nn.sigmoid(xt @ p["wii"] + h @ p["whi"] + p["bi"])
        f = jax.nn.sigmoid(xt @ p["wif"] + h @ p["whf"] + p["bf"])
        g = jnp.tanh(xt @ p["wig"] + h @ p["whg"] + p["bg"])
        o = jax.nn.sigmoid(xt @ p["wio"] + h @ p["who"] + p["bo"])
        c = f * c + i * g
        h = o * jnp.tanh(c)
    z1 = jnp.maximum(h @ p["w1"] + p["b1"], 0.0)
    z2 = jnp.maximum(z1 @ p["w2"] + p["b2"], 0.0)
    return z2 @ p["w3"] + p["b3"]


# ----------------------------------- Main ------------------------------------


if __name__ == "__main__":
    key = jax.random.PRNGKey(0)
    k_x, k_p = jax.random.split(key)

    B, T, F = 2, 8, 11  # small shapes consistent with LSTM(input_size=11, ...)
    x = jax.random.normal(k_x, (B, T, F), jnp.float32)
    params = init_params(k_p)
    packed = pack_params(params)

    out = lstm_model_forward(x, packed)
    out = jax.block_until_ready(out)
    assert out.shape == (B, 1), out.shape

    ref = reference_forward(x, params)
    assert jnp.allclose(out, ref, atol=1e-4, rtol=1e-4), (out, ref)

    print("KERNEL_OK")
</pallas_src>

<mosaic_0001>
module attributes {stable_mosaic.version = 11 : i64} {
  func.func @lstm_mlp_kernel(%arg0: memref<8x8x128xf32, #tpu.memory_space<vmem>>, %arg1: memref<256x512xf32, #tpu.memory_space<vmem>>, %arg2: memref<384x128xf32, #tpu.memory_space<vmem>>, %arg3: memref<8x128xf32, #tpu.memory_space<vmem>>, %arg4: memref<8x128xf32, #tpu.memory_space<vmem>>) attributes {dimension_semantics = [], scalar_prefetch = 0 : i64, scratch_operands = 0 : i64, tpu.core_type = #tpu.core_type<tc>} {
    %cst = arith.constant 0.000000e+00 : f32
    %0 = vector.broadcast %cst : f32 to vector<8x128xf32>
    %cst_0 = arith.constant 0.000000e+00 : f32
    %1 = vector.broadcast %cst_0 : f32 to vector<8x128xf32>
    %c0_i32 = arith.constant 0 : i32
    %2 = arith.index_cast %c0_i32 : i32 to index
    %c0 = arith.constant 0 : index
    %c0_1 = arith.constant 0 : index
    %3 = vector.load %arg0[%2, %c0, %c0_1] : memref<8x8x128xf32, #tpu.memory_space<vmem>>, vector<1x8x128xf32>
    %4 = vector.shape_cast %3 : vector<1x8x128xf32> to vector<8x128xf32>
    %5 = tpu.concatenate %4, %0 in 1 : vector<8x128xf32>, vector<8x128xf32> -> vector<8x256xf32>
    %c0_2 = arith.constant 0 : index
    %c0_3 = arith.constant 0 : index
    %6 = vector.load %arg1[%c0_2, %c0_3] : memref<256x512xf32, #tpu.memory_space<vmem>>, vector<256x512xf32>
    %cst_4 = arith.constant dense<0.000000e+00> : vector<8x512xf32>
    %7 = tpu.matmul %5, %6, %cst_4 {dimension_numbers = #tpu.dot_dimension_numbers<[1], [0], [0], [1], [0, 0, 1, 1], [], []>} : vector<8x256xf32>, vector<256x512xf32>, vector<8x512xf32> -> vector<8x512xf32>
    %8 = vector.extract_strided_slice %7 {offsets = [0, 0], sizes = [8, 128], strides = [1, 1]} : vector<8x512xf32> to vector<8x128xf32>
    %cst_5 = arith.constant 5.000000e-01 : f32
    %9 = vector.broadcast %cst_5 : f32 to vector<8x128xf32>
    %10 = arith.mulf %9, %8 : vector<8x128xf32>
    %11 = math.tanh %10 : vector<8x128xf32>
    %cst_6 = arith.constant 5.000000e-01 : f32
    %12 = vector.broadcast %cst_6 : f32 to vector<8x128xf32>
    %13 = arith.mulf %12, %11 : vector<8x128xf32>
    %cst_7 = arith.constant 5.000000e-01 : f32
    %14 = vector.broadcast %cst_7 : f32 to vector<8x128xf32>
    %15 = arith.addf %13, %14 : vector<8x128xf32>
    %16 = vector.extract_strided_slice %7 {offsets = [0, 128], sizes = [8, 128], strides = [1, 1]} : vector<8x512xf32> to vector<8x128xf32>
    %cst_8 = arith.constant 5.000000e-01 : f32
    %17 = vector.broadcast %cst_8 : f32 to vector<8x128xf32>
    %18 = arith.mulf %17, %16 : vector<8x128xf32>
    %19 = math.tanh %18 : vector<8x128xf32>
    %cst_9 = arith.constant 5.000000e-01 : f32
    %20 = vector.broadcast %cst_9 : f32 to vector<8x128xf32>
    %21 = arith.mulf %20, %19 : vector<8x128xf32>
    %cst_10 = arith.constant 5.000000e-01 : f32
    %22 = vector.broadcast %cst_10 : f32 to vector<8x128xf32>
    %23 = arith.addf %21, %22 : vector<8x128xf32>
    %24 = vector.extract_strided_slice %7 {offsets = [0, 256], sizes = [8, 128], strides = [1, 1]} : vector<8x512xf32> to vector<8x128xf32>
    %25 = math.tanh %24 : vector<8x128xf32>
    %26 = vector.extract_strided_slice %7 {offsets = [0, 384], sizes = [8, 128], strides = [1, 1]} : vector<8x512xf32> to vector<8x128xf32>
    %cst_11 = arith.constant 5.000000e-01 : f32
    %27 = vector.broadcast %cst_11 : f32 to vector<8x128xf32>
    %28 = arith.mulf %27, %26 : vector<8x128xf32>
    %29 = math.tanh %28 : vector<8x128xf32>
    %cst_12 = arith.constant 5.000000e-01 : f32
    %30 = vector.broadcast %cst_12 : f32 to vector<8x128xf32>
    %31 = arith.mulf %30, %29 : vector<8x128xf32>
    %cst_13 = arith.constant 5.000000e-01 : f32
    %32 = vector.broadcast %cst_13 : f32 to vector<8x128xf32>
    %33 = arith.addf %31, %32 : vector<8x128xf32>
    %34 = arith.mulf %23, %1 : vector<8x128xf32>
    %35 = arith.mulf %15, %25 : vector<8x128xf32>
    %36 = arith.addf %34, %35 : vector<8x128xf32>
    %37 = math.tanh %36 : vector<8x128xf32>
    %38 = arith.mulf %33, %37 : vector<8x128xf32>
    %c1_i32 = arith.constant 1 : i32
    %39 = arith.index_cast %c1_i32 : i32 to index
    %c0_14 = arith.constant 0 : index
    %c0_15 = arith.constant 0 : index
    %40 = vector.load %arg0[%39, %c0_14, %c0_15] : memref<8x8x128xf32, #tpu.memory_space<vmem>>, vector<1x8x128xf32>
    %41 = vector.shape_cast %40 : vector<1x8x128xf32> to vector<8x128xf32>
    %42 = tpu.concatenate %41, %38 in 1 : vector<8x128xf32>, vector<8x128xf32> -> vector<8x256xf32>
    %c0_16 = arith.constant 0 : index
    %c0_17 = arith.constant 0 : index
    %43 = vector.load %arg1[%c0_16, %c0_17] : memref<256x512xf32, #tpu.memory_space<vmem>>, vector<256x512xf32>
    %cst_18 = arith.constant dense<0.000000e+00> : vector<8x512xf32>
    %44 = tpu.matmul %42, %43, %cst_18 {dimension_numbers = #tpu.dot_dimension_numbers<[1], [0], [0], [1], [0, 0, 1, 1], [], []>} : vector<8x256xf32>, vector<256x512xf32>, vector<8x512xf32> -> vector<8x512xf32>
    %45 = vector.extract_strided_slice %44 {offsets = [0, 0], sizes = [8, 128], strides = [1, 1]} : vector<8x512xf32> to vector<8x128xf32>
    %cst_19 = arith.constant 5.000000e-01 : f32
    %46 = vector.broadcast %cst_19 : f32 to vector<8x128xf32>
    %47 = arith.mulf %46, %45 : vector<8x128xf32>
    %48 = math.tanh %47 : vector<8x128xf32>
    %cst_20 = arith.constant 5.000000e-01 : f32
    %49 = vector.broadcast %cst_20 : f32 to vector<8x128xf32>
    %50 = arith.mulf %49, %48 : vector<8x128xf32>
    %cst_21 = arith.constant 5.000000e-01 : f32
    %51 = vector.broadcast %cst_21 : f32 to vector<8x128xf32>
    %52 = arith.addf %50, %51 : vector<8x128xf32>
    %53 = vector.extract_strided_slice %44 {offsets = [0, 128], sizes = [8, 128], strides = [1, 1]} : vector<8x512xf32> to vector<8x128xf32>
    %cst_22 = arith.constant 5.000000e-01 : f32
    %54 = vector.broadcast %cst_22 : f32 to vector<8x128xf32>
    %55 = arith.mulf %54, %53 : vector<8x128xf32>
    %56 = math.tanh %55 : vector<8x128xf32>
    %cst_23 = arith.constant 5.000000e-01 : f32
    %57 = vector.broadcast %cst_23 : f32 to vector<8x128xf32>
    %58 = arith.mulf %57, %56 : vector<8x128xf32>
    %cst_24 = arith.constant 5.000000e-01 : f32
    %59 = vector.broadcast %cst_24 : f32 to vector<8x128xf32>
    %60 = arith.addf %58, %59 : vector<8x128xf32>
    %61 = vector.extract_strided_slice %44 {offsets = [0, 256], sizes = [8, 128], strides = [1, 1]} : vector<8x512xf32> to vector<8x128xf32>
    %62 = math.tanh %61 : vector<8x128xf32>
    %63 = vector.extract_strided_slice %44 {offsets = [0, 384], sizes = [8, 128], strides = [1, 1]} : vector<8x512xf32> to vector<8x128xf32>
    %cst_25 = arith.constant 5.000000e-01 : f32
    %64 = vector.broadcast %cst_25 : f32 to vector<8x128xf32>
    %65 = arith.mulf %64, %63 : vector<8x128xf32>
    %66 = math.tanh %65 : vector<8x128xf32>
    %cst_26 = arith.constant 5.000000e-01 : f32
    %67 = vector.broadcast %cst_26 : f32 to vector<8x128xf32>
    %68 = arith.mulf %67, %66 : vector<8x128xf32>
    %cst_27 = arith.constant 5.000000e-01 : f32
    %69 = vector.broadcast %cst_27 : f32 to vector<8x128xf32>
    %70 = arith.addf %68, %69 : vector<8x128xf32>
    %71 = arith.mulf %60, %36 : vector<8x128xf32>
    %72 = arith.mulf %52, %62 : vector<8x128xf32>
    %73 = arith.addf %71, %72 : vector<8x128xf32>
    %74 = math.tanh %73 : vector<8x128xf32>
    %75 = arith.mulf %70, %74 : vector<8x128xf32>
    %c2_i32 = arith.constant 2 : i32
    %76 = arith.index_cast %c2_i32 : i32 to index
    %c0_28 = arith.constant 0 : index
    %c0_29 = arith.constant 0 : index
    %77 = vector.load %arg0[%76, %c0_28, %c0_29] : memref<8x8x128xf32, #tpu.memory_space<vmem>>, vector<1x8x128xf32>
    %78 = vector.shape_cast %77 : vector<1x8x128xf32> to vector<8x128xf32>
    %79 = tpu.concatenate %78, %75 in 1 : vector<8x128xf32>, vector<8x128xf32> -> vector<8x256xf32>
    %c0_30 = arith.constant 0 : index
    %c0_31 = arith.constant 0 : index
    %80 = vector.load %arg1[%c0_30, %c0_31] : memref<256x512xf32, #tpu.memory_space<vmem>>, vector<256x512xf32>
    %cst_32 = arith.constant dense<0.000000e+00> : vector<8x512xf32>
    %81 = tpu.matmul %79, %80, %cst_32 {dimension_numbers = #tpu.dot_dimension_numbers<[1], [0], [0], [1], [0, 0, 1, 1], [], []>} : vector<8x256xf32>, vector<256x512xf32>, vector<8x512xf32> -> vector<8x512xf32>
    %82 = vector.extract_strided_slice %81 {offsets = [0, 0], sizes = [8, 128], strides = [1, 1]} : vector<8x512xf32> to vector<8x128xf32>
    %cst_33 = arith.constant 5.000000e-01 : f32
    %83 = vector.broadcast %cst_33 : f32 to vector<8x128xf32>
    %84 = arith.mulf %83, %82 : vector<8x128xf32>
    %85 = math.tanh %84 : vector<8x128xf32>
    %cst_34 = arith.constant 5.000000e-01 : f32
    %86 = vector.broadcast %cst_34 : f32 to vector<8x128xf32>
    %87 = arith.mulf %86, %85 : vector<8x128xf32>
    %cst_35 = arith.constant 5.000000e-01 : f32
    %88 = vector.broadcast %cst_35 : f32 to vector<8x128xf32>
    %89 = arith.addf %87, %88 : vector<8x128xf32>
    %90 = vector.extract_strided_slice %81 {offsets = [0, 128], sizes = [8, 128], strides = [1, 1]} : vector<8x512xf32> to vector<8x128xf32>
    %cst_36 = arith.constant 5.000000e-01 : f32
    %91 = vector.broadcast %cst_36 : f32 to vector<8x128xf32>
    %92 = arith.mulf %91, %90 : vector<8x128xf32>
    %93 = math.tanh %92 : vector<8x128xf32>
    %cst_37 = arith.constant 5.000000e-01 : f32
    %94 = vector.broadcast %cst_37 : f32 to vector<8x128xf32>
    %95 = arith.mulf %94, %93 : vector<8x128xf32>
    %cst_38 = arith.constant 5.000000e-01 : f32
    %96 = vector.broadcast %cst_38 : f32 to vector<8x128xf32>
    %97 = arith.addf %95, %96 : vector<8x128xf32>
    %98 = vector.extract_strided_slice %81 {offsets = [0, 256], sizes = [8, 128], strides = [1, 1]} : vector<8x512xf32> to vector<8x128xf32>
    %99 = math.tanh %98 : vector<8x128xf32>
    %100 = vector.extract_strided_slice %81 {offsets = [0, 384], sizes = [8, 128], strides = [1, 1]} : vector<8x512xf32> to vector<8x128xf32>
    %cst_39 = arith.constant 5.000000e-01 : f32
    %101 = vector.broadcast %cst_39 : f32 to vector<8x128xf32>
    %102 = arith.mulf %101, %100 : vector<8x128xf32>
    %103 = math.tanh %102 : vector<8x128xf32>
    %cst_40 = arith.constant 5.000000e-01 : f32
    %104 = vector.broadcast %cst_40 : f32 to vector<8x128xf32>
    %105 = arith.mulf %104, %103 : vector<8x128xf32>
    %cst_41 = arith.constant 5.000000e-01 : f32
    %106 = vector.broadcast %cst_41 : f32 to vector<8x128xf32>
    %107 = arith.addf %105, %106 : vector<8x128xf32>
    %108 = arith.mulf %97, %73 : vector<8x128xf32>
    %109 = arith.mulf %89, %99 : vector<8x128xf32>
    %110 = arith.addf %108, %109 : vector<8x128xf32>
    %111 = math.tanh %110 : vector<8x128xf32>
    %112 = arith.mulf %107, %111 : vector<8x128xf32>
    %c3_i32 = arith.constant 3 : i32
    %113 = arith.index_cast %c3_i32 : i32 to index
    %c0_42 = arith.constant 0 : index
    %c0_43 = arith.constant 0 : index
    %114 = vector.load %arg0[%113, %c0_42, %c0_43] : memref<8x8x128xf32, #tpu.memory_space<vmem>>, vector<1x8x128xf32>
    %115 = vector.shape_cast %114 : vector<1x8x128xf32> to vector<8x128xf32>
    %116 = tpu.concatenate %115, %112 in 1 : vector<8x128xf32>, vector<8x128xf32> -> vector<8x256xf32>
    %c0_44 = arith.constant 0 : index
    %c0_45 = arith.constant 0 : index
    %117 = vector.load %arg1[%c0_44, %c0_45] : memref<256x512xf32, #tpu.memory_space<vmem>>, vector<256x512xf32>
    %cst_46 = arith.constant dense<0.000000e+00> : vector<8x512xf32>
    %118 = tpu.matmul %116, %117, %cst_46 {dimension_numbers = #tpu.dot_dimension_numbers<[1], [0], [0], [1], [0, 0, 1, 1], [], []>} : vector<8x256xf32>, vector<256x512xf32>, vector<8x512xf32> -> vector<8x512xf32>
    %119 = vector.extract_strided_slice %118 {offsets = [0, 0], sizes = [8, 128], strides = [1, 1]} : vector<8x512xf32> to vector<8x128xf32>
    %cst_47 = arith.constant 5.000000e-01 : f32
    %120 = vector.broadcast %cst_47 : f32 to vector<8x128xf32>
    %121 = arith.mulf %120, %119 : vector<8x128xf32>
    %122 = math.tanh %121 : vector<8x128xf32>
    %cst_48 = arith.constant 5.000000e-01 : f32
    %123 = vector.broadcast %cst_48 : f32 to vector<8x128xf32>
    %124 = arith.mulf %123, %122 : vector<8x128xf32>
    %cst_49 = arith.constant 5.000000e-01 : f32
    %125 = vector.broadcast %cst_49 : f32 to vector<8x128xf32>
    %126 = arith.addf %124, %125 : vector<8x128xf32>
    %127 = vector.extract_strided_slice %118 {offsets = [0, 128], sizes = [8, 128], strides = [1, 1]} : vector<8x512xf32> to vector<8x128xf32>
    %cst_50 = arith.constant 5.000000e-01 : f32
    %128 = vector.broadcast %cst_50 : f32 to vector<8x128xf32>
    %129 = arith.mulf %128, %127 : vector<8x128xf32>
    %130 = math.tanh %129 : vector<8x128xf32>
    %cst_51 = arith.constant 5.000000e-01 : f32
    %131 = vector.broadcast %cst_51 : f32 to vector<8x128xf32>
    %132 = arith.mulf %131, %130 : vector<8x128xf32>
    %cst_52 = arith.constant 5.000000e-01 : f32
    %133 = vector.broadcast %cst_52 : f32 to vector<8x128xf32>
    %134 = arith.addf %132, %133 : vector<8x128xf32>
    %135 = vector.extract_strided_slice %118 {offsets = [0, 256], sizes = [8, 128], strides = [1, 1]} : vector<8x512xf32> to vector<8x128xf32>
    %136 = math.tanh %135 : vector<8x128xf32>
    %137 = vector.extract_strided_slice %118 {offsets = [0, 384], sizes = [8, 128], strides = [1, 1]} : vector<8x512xf32> to vector<8x128xf32>
    %cst_53 = arith.constant 5.000000e-01 : f32
    %138 = vector.broadcast %cst_53 : f32 to vector<8x128xf32>
    %139 = arith.mulf %138, %137 : vector<8x128xf32>
    %140 = math.tanh %139 : vector<8x128xf32>
    %cst_54 = arith.constant 5.000000e-01 : f32
    %141 = vector.broadcast %cst_54 : f32 to vector<8x128xf32>
    %142 = arith.mulf %141, %140 : vector<8x128xf32>
    %cst_55 = arith.constant 5.000000e-01 : f32
    %143 = vector.broadcast %cst_55 : f32 to vector<8x128xf32>
    %144 = arith.addf %142, %143 : vector<8x128xf32>
    %145 = arith.mulf %134, %110 : vector<8x128xf32>
    %146 = arith.mulf %126, %136 : vector<8x128xf32>
    %147 = arith.addf %145, %146 : vector<8x128xf32>
    %148 = math.tanh %147 : vector<8x128xf32>
    %149 = arith.mulf %144, %148 : vector<8x128xf32>
    %c4_i32 = arith.constant 4 : i32
    %150 = arith.index_cast %c4_i32 : i32 to index
    %c0_56 = arith.constant 0 : index
    %c0_57 = arith.constant 0 : index
    %151 = vector.load %arg0[%150, %c0_56, %c0_57] : memref<8x8x128xf32, #tpu.memory_space<vmem>>, vector<1x8x128xf32>
    %152 = vector.shape_cast %151 : vector<1x8x128xf32> to vector<8x128xf32>
    %153 = tpu.concatenate %152, %149 in 1 : vector<8x128xf32>, vector<8x128xf32> -> vector<8x256xf32>
    %c0_58 = arith.constant 0 : index
    %c0_59 = arith.constant 0 : index
    %154 = vector.load %arg1[%c0_58, %c0_59] : memref<256x512xf32, #tpu.memory_space<vmem>>, vector<256x512xf32>
    %cst_60 = arith.constant dense<0.000000e+00> : vector<8x512xf32>
    %155 = tpu.matmul %153, %154, %cst_60 {dimension_numbers = #tpu.dot_dimension_numbers<[1], [0], [0], [1], [0, 0, 1, 1], [], []>} : vector<8x256xf32>, vector<256x512xf32>, vector<8x512xf32> -> vector<8x512xf32>
    %156 = vector.extract_strided_slice %155 {offsets = [0, 0], sizes = [8, 128], strides = [1, 1]} : vector<8x512xf32> to vector<8x128xf32>
    %cst_61 = arith.constant 5.000000e-01 : f32
    %157 = vector.broadcast %cst_61 : f32 to vector<8x128xf32>
    %158 = arith.mulf %157, %156 : vector<8x128xf32>
    %159 = math.tanh %158 : vector<8x128xf32>
    %cst_62 = arith.constant 5.000000e-01 : f32
    %160 = vector.broadcast %cst_62 : f32 to vector<8x128xf32>
    %161 = arith.mulf %160, %159 : vector<8x128xf32>
    %cst_63 = arith.constant 5.000000e-01 : f32
    %162 = vector.broadcast %cst_63 : f32 to vector<8x128xf32>
    %163 = arith.addf %161, %162 : vector<8x128xf32>
    %164 = vector.extract_strided_slice %155 {offsets = [0, 128], sizes = [8, 128], strides = [1, 1]} : vector<8x512xf32> to vector<8x128xf32>
    %cst_64 = arith.constant 5.000000e-01 : f32
    %165 = vector.broadcast %cst_64 : f32 to vector<8x128xf32>
    %166 = arith.mulf %165, %164 : vector<8x128xf32>
    %167 = math.tanh %166 : vector<8x128xf32>
    %cst_65 = arith.constant 5.000000e-01 : f32
    %168 = vector.broadcast %cst_65 : f32 to vector<8x128xf32>
    %169 = arith.mulf %168, %167 : vector<8x128xf32>
    %cst_66 = arith.constant 5.000000e-01 : f32
    %170 = vector.broadcast %cst_66 : f32 to vector<8x128xf32>
    %171 = arith.addf %169, %170 : vector<8x128xf32>
    %172 = vector.extract_strided_slice %155 {offsets = [0, 256], sizes = [8, 128], strides = [1, 1]} : vector<8x512xf32> to vector<8x128xf32>
    %173 = math.tanh %172 : vector<8x128xf32>
    %174 = vector.extract_strided_slice %155 {offsets = [0, 384], sizes = [8, 128], strides = [1, 1]} : vector<8x512xf32> to vector<8x128xf32>
    %cst_67 = arith.constant 5.000000e-01 : f32
    %175 = vector.broadcast %cst_67 : f32 to vector<8x128xf32>
    %176 = arith.mulf %175, %174 : vector<8x128xf32>
    %177 = math.tanh %176 : vector<8x128xf32>
    %cst_68 = arith.constant 5.000000e-01 : f32
    %178 = vector.broadcast %cst_68 : f32 to vector<8x128xf32>
    %179 = arith.mulf %178, %177 : vector<8x128xf32>
    %cst_69 = arith.constant 5.000000e-01 : f32
    %180 = vector.broadcast %cst_69 : f32 to vector<8x128xf32>
    %181 = arith.addf %179, %180 : vector<8x128xf32>
    %182 = arith.mulf %171, %147 : vector<8x128xf32>
    %183 = arith.mulf %163, %173 : vector<8x128xf32>
    %184 = arith.addf %182, %183 : vector<8x128xf32>
    %185 = math.tanh %184 : vector<8x128xf32>
    %186 = arith.mulf %181, %185 : vector<8x128xf32>
    %c5_i32 = arith.constant 5 : i32
    %187 = arith.index_cast %c5_i32 : i32 to index
    %c0_70 = arith.constant 0 : index
    %c0_71 = arith.constant 0 : index
    %188 = vector.load %arg0[%187, %c0_70, %c0_71] : memref<8x8x128xf32, #tpu.memory_space<vmem>>, vector<1x8x128xf32>
    %189 = vector.shape_cast %188 : vector<1x8x128xf32> to vector<8x128xf32>
    %190 = tpu.concatenate %189, %186 in 1 : vector<8x128xf32>, vector<8x128xf32> -> vector<8x256xf32>
    %c0_72 = arith.constant 0 : index
    %c0_73 = arith.constant 0 : index
    %191 = vector.load %arg1[%c0_72, %c0_73] : memref<256x512xf32, #tpu.memory_space<vmem>>, vector<256x512xf32>
    %cst_74 = arith.constant dense<0.000000e+00> : vector<8x512xf32>
    %192 = tpu.matmul %190, %191, %cst_74 {dimension_numbers = #tpu.dot_dimension_numbers<[1], [0], [0], [1], [0, 0, 1, 1], [], []>} : vector<8x256xf32>, vector<256x512xf32>, vector<8x512xf32> -> vector<8x512xf32>
    %193 = vector.extract_strided_slice %192 {offsets = [0, 0], sizes = [8, 128], strides = [1, 1]} : vector<8x512xf32> to vector<8x128xf32>
    %cst_75 = arith.constant 5.000000e-01 : f32
    %194 = vector.broadcast %cst_75 : f32 to vector<8x128xf32>
    %195 = arith.mulf %194, %193 : vector<8x128xf32>
    %196 = math.tanh %195 : vector<8x128xf32>
    %cst_76 = arith.constant 5.000000e-01 : f32
    %197 = vector.broadcast %cst_76 : f32 to vector<8x128xf32>
    %198 = arith.mulf %197, %196 : vector<8x128xf32>
    %cst_77 = arith.constant 5.000000e-01 : f32
    %199 = vector.broadcast %cst_77 : f32 to vector<8x128xf32>
    %200 = arith.addf %198, %199 : vector<8x128xf32>
    %201 = vector.extract_strided_slice %192 {offsets = [0, 128], sizes = [8, 128], strides = [1, 1]} : vector<8x512xf32> to vector<8x128xf32>
    %cst_78 = arith.constant 5.000000e-01 : f32
    %202 = vector.broadcast %cst_78 : f32 to vector<8x128xf32>
    %203 = arith.mulf %202, %201 : vector<8x128xf32>
    %204 = math.tanh %203 : vector<8x128xf32>
    %cst_79 = arith.constant 5.000000e-01 : f32
    %205 = vector.broadcast %cst_79 : f32 to vector<8x128xf32>
    %206 = arith.mulf %205, %204 : vector<8x128xf32>
    %cst_80 = arith.constant 5.000000e-01 : f32
    %207 = vector.broadcast %cst_80 : f32 to vector<8x128xf32>
    %208 = arith.addf %206, %207 : vector<8x128xf32>
    %209 = vector.extract_strided_slice %192 {offsets = [0, 256], sizes = [8, 128], strides = [1, 1]} : vector<8x512xf32> to vector<8x128xf32>
    %210 = math.tanh %209 : vector<8x128xf32>
    %211 = vector.extract_strided_slice %192 {offsets = [0, 384], sizes = [8, 128], strides = [1, 1]} : vector<8x512xf32> to vector<8x128xf32>
    %cst_81 = arith.constant 5.000000e-01 : f32
    %212 = vector.broadcast %cst_81 : f32 to vector<8x128xf32>
    %213 = arith.mulf %212, %211 : vector<8x128xf32>
    %214 = math.tanh %213 : vector<8x128xf32>
    %cst_82 = arith.constant 5.000000e-01 : f32
    %215 = vector.broadcast %cst_82 : f32 to vector<8x128xf32>
    %216 = arith.mulf %215, %214 : vector<8x128xf32>
    %cst_83 = arith.constant 5.000000e-01 : f32
    %217 = vector.broadcast %cst_83 : f32 to vector<8x128xf32>
    %218 = arith.addf %216, %217 : vector<8x128xf32>
    %219 = arith.mulf %208, %184 : vector<8x128xf32>
    %220 = arith.mulf %200, %210 : vector<8x128xf32>
    %221 = arith.addf %219, %220 : vector<8x128xf32>
    %222 = math.tanh %221 : vector<8x128xf32>
    %223 = arith.mulf %218, %222 : vector<8x128xf32>
    %c6_i32 = arith.constant 6 : i32
    %224 = arith.index_cast %c6_i32 : i32 to index
    %c0_84 = arith.constant 0 : index
    %c0_85 = arith.constant 0 : index
    %225 = vector.load %arg0[%224, %c0_84, %c0_85] : memref<8x8x128xf32, #tpu.memory_space<vmem>>, vector<1x8x128xf32>
    %226 = vector.shape_cast %225 : vector<1x8x128xf32> to vector<8x128xf32>
    %227 = tpu.concatenate %226, %223 in 1 : vector<8x128xf32>, vector<8x128xf32> -> vector<8x256xf32>
    %c0_86 = arith.constant 0 : index
    %c0_87 = arith.constant 0 : index
    %228 = vector.load %arg1[%c0_86, %c0_87] : memref<256x512xf32, #tpu.memory_space<vmem>>, vector<256x512xf32>
    %cst_88 = arith.constant dense<0.000000e+00> : vector<8x512xf32>
    %229 = tpu.matmul %227, %228, %cst_88 {dimension_numbers = #tpu.dot_dimension_numbers<[1], [0], [0], [1], [0, 0, 1, 1], [], []>} : vector<8x256xf32>, vector<256x512xf32>, vector<8x512xf32> -> vector<8x512xf32>
    %230 = vector.extract_strided_slice %229 {offsets = [0, 0], sizes = [8, 128], strides = [1, 1]} : vector<8x512xf32> to vector<8x128xf32>
    %cst_89 = arith.constant 5.000000e-01 : f32
    %231 = vector.broadcast %cst_89 : f32 to vector<8x128xf32>
    %232 = arith.mulf %231, %230 : vector<8x128xf32>
    %233 = math.tanh %232 : vector<8x128xf32>
    %cst_90 = arith.constant 5.000000e-01 : f32
    %234 = vector.broadcast %cst_90 : f32 to vector<8x128xf32>
    %235 = arith.mulf %234, %233 : vector<8x128xf32>
    %cst_91 = arith.constant 5.000000e-01 : f32
    %236 = vector.broadcast %cst_91 : f32 to vector<8x128xf32>
    %237 = arith.addf %235, %236 : vector<8x128xf32>
    %238 = vector.extract_strided_slice %229 {offsets = [0, 128], sizes = [8, 128], strides = [1, 1]} : vector<8x512xf32> to vector<8x128xf32>
    %cst_92 = arith.constant 5.000000e-01 : f32
    %239 = vector.broadcast %cst_92 : f32 to vector<8x128xf32>
    %240 = arith.mulf %239, %238 : vector<8x128xf32>
    %241 = math.tanh %240 : vector<8x128xf32>
    %cst_93 = arith.constant 5.000000e-01 : f32
    %242 = vector.broadcast %cst_93 : f32 to vector<8x128xf32>
    %243 = arith.mulf %242, %241 : vector<8x128xf32>
    %cst_94 = arith.constant 5.000000e-01 : f32
    %244 = vector.broadcast %cst_94 : f32 to vector<8x128xf32>
    %245 = arith.addf %243, %244 : vector<8x128xf32>
    %246 = vector.extract_strided_slice %229 {offsets = [0, 256], sizes = [8, 128], strides = [1, 1]} : vector<8x512xf32> to vector<8x128xf32>
    %247 = math.tanh %246 : vector<8x128xf32>
    %248 = vector.extract_strided_slice %229 {offsets = [0, 384], sizes = [8, 128], strides = [1, 1]} : vector<8x512xf32> to vector<8x128xf32>
    %cst_95 = arith.constant 5.000000e-01 : f32
    %249 = vector.broadcast %cst_95 : f32 to vector<8x128xf32>
    %250 = arith.mulf %249, %248 : vector<8x128xf32>
    %251 = math.tanh %250 : vector<8x128xf32>
    %cst_96 = arith.constant 5.000000e-01 : f32
    %252 = vector.broadcast %cst_96 : f32 to vector<8x128xf32>
    %253 = arith.mulf %252, %251 : vector<8x128xf32>
    %cst_97 = arith.constant 5.000000e-01 : f32
    %254 = vector.broadcast %cst_97 : f32 to vector<8x128xf32>
    %255 = arith.addf %253, %254 : vector<8x128xf32>
    %256 = arith.mulf %245, %221 : vector<8x128xf32>
    %257 = arith.mulf %237, %247 : vector<8x128xf32>
    %258 = arith.addf %256, %257 : vector<8x128xf32>
    %259 = math.tanh %258 : vector<8x128xf32>
    %260 = arith.mulf %255, %259 : vector<8x128xf32>
    %c7_i32 = arith.constant 7 : i32
    %261 = arith.index_cast %c7_i32 : i32 to index
    %c0_98 = arith.constant 0 : index
    %c0_99 = arith.constant 0 : index
    %262 = vector.load %arg0[%261, %c0_98, %c0_99] : memref<8x8x128xf32, #tpu.memory_space<vmem>>, vector<1x8x128xf32>
    %263 = vector.shape_cast %262 : vector<1x8x128xf32> to vector<8x128xf32>
    %264 = tpu.concatenate %263, %260 in 1 : vector<8x128xf32>, vector<8x128xf32> -> vector<8x256xf32>
    %c0_100 = arith.constant 0 : index
    %c0_101 = arith.constant 0 : index
    %265 = vector.load %arg1[%c0_100, %c0_101] : memref<256x512xf32, #tpu.memory_space<vmem>>, vector<256x512xf32>
    %cst_102 = arith.constant dense<0.000000e+00> : vector<8x512xf32>
    %266 = tpu.matmul %264, %265, %cst_102 {dimension_numbers = #tpu.dot_dimension_numbers<[1], [0], [0], [1], [0, 0, 1, 1], [], []>} : vector<8x256xf32>, vector<256x512xf32>, vector<8x512xf32> -> vector<8x512xf32>
    %267 = vector.extract_strided_slice %266 {offsets = [0, 0], sizes = [8, 128], strides = [1, 1]} : vector<8x512xf32> to vector<8x128xf32>
    %cst_103 = arith.constant 5.000000e-01 : f32
    %268 = vector.broadcast %cst_103 : f32 to vector<8x128xf32>
    %269 = arith.mulf %268, %267 : vector<8x128xf32>
    %270 = math.tanh %269 : vector<8x128xf32>
    %cst_104 = arith.constant 5.000000e-01 : f32
    %271 = vector.broadcast %cst_104 : f32 to vector<8x128xf32>
    %272 = arith.mulf %271, %270 : vector<8x128xf32>
    %cst_105 = arith.constant 5.000000e-01 : f32
    %273 = vector.broadcast %cst_105 : f32 to vector<8x128xf32>
    %274 = arith.addf %272, %273 : vector<8x128xf32>
    %275 = vector.extract_strided_slice %266 {offsets = [0, 128], sizes = [8, 128], strides = [1, 1]} : vector<8x512xf32> to vector<8x128xf32>
    %cst_106 = arith.constant 5.000000e-01 : f32
    %276 = vector.broadcast %cst_106 : f32 to vector<8x128xf32>
    %277 = arith.mulf %276, %275 : vector<8x128xf32>
    %278 = math.tanh %277 : vector<8x128xf32>
    %cst_107 = arith.constant 5.000000e-01 : f32
    %279 = vector.broadcast %cst_107 : f32 to vector<8x128xf32>
    %280 = arith.mulf %279, %278 : vector<8x128xf32>
    %cst_108 = arith.constant 5.000000e-01 : f32
    %281 = vector.broadcast %cst_108 : f32 to vector<8x128xf32>
    %282 = arith.addf %280, %281 : vector<8x128xf32>
    %283 = vector.extract_strided_slice %266 {offsets = [0, 256], sizes = [8, 128], strides = [1, 1]} : vector<8x512xf32> to vector<8x128xf32>
    %284 = math.tanh %283 : vector<8x128xf32>
    %285 = vector.extract_strided_slice %266 {offsets = [0, 384], sizes = [8, 128], strides = [1, 1]} : vector<8x512xf32> to vector<8x128xf32>
    %cst_109 = arith.constant 5.000000e-01 : f32
    %286 = vector.broadcast %cst_109 : f32 to vector<8x128xf32>
    %287 = arith.mulf %286, %285 : vector<8x128xf32>
    %288 = math.tanh %287 : vector<8x128xf32>
    %cst_110 = arith.constant 5.000000e-01 : f32
    %289 = vector.broadcast %cst_110 : f32 to vector<8x128xf32>
    %290 = arith.mulf %289, %288 : vector<8x128xf32>
    %cst_111 = arith.constant 5.000000e-01 : f32
    %291 = vector.broadcast %cst_111 : f32 to vector<8x128xf32>
    %292 = arith.addf %290, %291 : vector<8x128xf32>
    %293 = arith.mulf %282, %258 : vector<8x128xf32>
    %294 = arith.mulf %274, %284 : vector<8x128xf32>
    %295 = arith.addf %293, %294 : vector<8x128xf32>
    %296 = math.tanh %295 : vector<8x128xf32>
    %297 = arith.mulf %292, %296 : vector<8x128xf32>
    %c8_i32 = arith.constant 8 : i32
    %c0_112 = arith.constant 0 : index
    %c0_113 = arith.constant 0 : index
    %298 = vector.load %arg2[%c0_112, %c0_113] : memref<384x128xf32, #tpu.memory_space<vmem>>, vector<128x128xf32>
    %cst_114 = arith.constant dense<0.000000e+00> : vector<8x128xf32>
    %299 = tpu.matmul %297, %298, %cst_114 {dimension_numbers = #tpu.dot_dimension_numbers<[1], [0], [0], [1], [0, 0, 1, 1], [], []>} : vector<8x128xf32>, vector<128x128xf32>, vector<8x128xf32> -> vector<8x128xf32>
    %c0_115 = arith.constant 0 : index
    %c0_116 = arith.constant 0 : index
    %300 = vector.load %arg3[%c0_115, %c0_116] : memref<8x128xf32, #tpu.memory_space<vmem>>, vector<1x128xf32>
    %301 = vector.broadcast %300 : vector<1x128xf32> to vector<8x128xf32>
    %302 = arith.addf %299, %301 : vector<8x128xf32>
    %cst_117 = arith.constant 0.000000e+00 : f32
    %303 = vector.broadcast %cst_117 : f32 to vector<8x128xf32>
    %304 = arith.maximumf %302, %303 : vector<8x128xf32>
    %c128 = arith.constant 128 : index
    %c0_118 = arith.constant 0 : index
    %305 = vector.load %arg2[%c128, %c0_118] : memref<384x128xf32, #tpu.memory_space<vmem>>, vector<128x128xf32>
    %cst_119 = arith.constant dense<0.000000e+00> : vector<8x128xf32>
    %306 = tpu.matmul %304, %305, %cst_119 {dimension_numbers = #tpu.dot_dimension_numbers<[1], [0], [0], [1], [0, 0, 1, 1], [], []>} : vector<8x128xf32>, vector<128x128xf32>, vector<8x128xf32> -> vector<8x128xf32>
    %c1 = arith.constant 1 : index
    %c0_120 = arith.constant 0 : index
    %307 = vector.load %arg3[%c1, %c0_120] : memref<8x128xf32, #tpu.memory_space<vmem>>, vector<1x128xf32>
    %308 = vector.broadcast %307 : vector<1x128xf32> to vector<8x128xf32>
    %309 = arith.addf %306, %308 : vector<8x128xf32>
    %cst_121 = arith.constant 0.000000e+00 : f32
    %310 = vector.broadcast %cst_121 : f32 to vector<8x128xf32>
    %311 = arith.maximumf %309, %310 : vector<8x128xf32>
    %c256 = arith.constant 256 : index
    %c0_122 = arith.constant 0 : index
    %312 = vector.load %arg2[%c256, %c0_122] : memref<384x128xf32, #tpu.memory_space<vmem>>, vector<128x128xf32>
    %cst_123 = arith.constant dense<0.000000e+00> : vector<8x128xf32>
    %313 = tpu.matmul %311, %312, %cst_123 {dimension_numbers = #tpu.dot_dimension_numbers<[1], [0], [0], [1], [0, 0, 1, 1], [], []>} : vector<8x128xf32>, vector<128x128xf32>, vector<8x128xf32> -> vector<8x128xf32>
    %c2 = arith.constant 2 : index
    %c0_124 = arith.constant 0 : index
    %314 = vector.load %arg3[%c2, %c0_124] : memref<8x128xf32, #tpu.memory_space<vmem>>, vector<1x128xf32>
    %315 = vector.broadcast %314 : vector<1x128xf32> to vector<8x128xf32>
    %316 = arith.addf %313, %315 : vector<8x128xf32>
    %c0_125 = arith.constant 0 : index
    %c0_126 = arith.constant 0 : index
    %317 = vector.load %arg4[%c0_125, %c0_126] : memref<8x128xf32, #tpu.memory_space<vmem>>, vector<8x128xf32>
    tpu.vector_store %arg4[%c0_125, %c0_126], %316 {strides = array<i32>} : memref<8x128xf32, #tpu.memory_space<vmem>>, vector<8x128xf32>,
    return
  }
}

</mosaic_0001>

<llo_original>
// kernel: lstm_model_forward.1
$region0: #{lstm_model_forward.1}
  #allocation0 [shape = 'u32[]', space=smem, size = 0x4, offset = 0x4, fixed_abs, tag = 'smem constant byte address 0x4 - core index']
  #allocation1 [shape = 'u32[144,128]{1,0:T(1,128)}', space=vmem, size = 0x12000, scoped, tag = 'internal scratch']
  %s0 = inlined_call_operand.vmem [shape: f32[8,8,128], index: 0, kind: input, shape index: {}]
  %s1 = inlined_call_operand.hbm [shape: f32[256,512], index: 1, kind: input, shape index: {}]
  %s2 = inlined_call_operand.hbm [shape: f32[384,128], index: 2, kind: input, shape index: {}]
  %s3 = inlined_call_operand.vmem [shape: f32[8,128], index: 3, kind: input, shape index: {}]
  %s4 = inlined_call_operand.vmem [shape: f32[8,128], index: 4, kind: output, shape index: {}]
  %s5 = sld [smem:[#allocation0]]
  $region34: #{lstm_model_forward.1} parent=0
    _
  %s7 = ssub.s32 1, %s5
  %s8 = scalar_select 0, %s7, %s5
  $region1: #{lstm_model_forward.1} parent=0
    #allocation2 [shape = 'u8[524288]{0}', space=vmem, size = 0x80000, scoped, tag = 'input window, operand 1, single buffered']
    #allocation3 [shape = 's32[1]{0}', space=sflag, size = 0x4, scoped, tag = 'scoped memory for lstm_model_forward.1']
    #allocation4 [shape = 'u8[196608]{0}', space=vmem, size = 0x30000, scoped, tag = 'input window, operand 2, single buffered']
    #allocation5 [shape = 's32[1]{0}', space=sflag, size = 0x4, scoped, tag = 'scoped memory for lstm_model_forward.1']
    %9 = vsyncpa [#allocation3], 0
    %10 = vsyncpa [#allocation5], 0
    // Predicated region
    $region2: #{lstm_model_forward.1} parent=1 // pred_check
      _
    $region3: #{lstm_model_forward.1} parent=1 // pred_check_branch
      %12 = sbr.rel (0) target = $region5
    $region4: #{lstm_model_forward.1} parent=1 // pred_region
      _
    $region5: #{lstm_model_forward.1} parent=1 // pred_fallthru
      _
    // Predicated region
    $region6: #{lstm_model_forward.1} parent=1 // pred_check
      _
    $region7: #{lstm_model_forward.1} parent=1 // pred_check_branch
      %14 = sbr.rel (0) target = $region9
    $region8: #{lstm_model_forward.1} parent=1 // pred_region
      %s16 = ssub.s32 16384, 16384
      %17 = vsyncadd [#allocation3], %s16
      %s18 = sshll.u32 [#allocation2], 4
      %s19 = int_to_ptr.vmem [resolvable:$true] %s18
      %24 = dma.hbm_to_vmem [thread:$0]  %s1, 16384, %s19, [#allocation3], 512, 512, 32
    $region9: #{lstm_model_forward.1} parent=1 // pred_fallthru
      _
    // Predicated region
    $region10: #{lstm_model_forward.1} parent=1 // pred_check
      _
    $region11: #{lstm_model_forward.1} parent=1 // pred_check_branch
      %26 = sbr.rel (0) target = $region13
    $region12: #{lstm_model_forward.1} parent=1 // pred_region
      %s28 = ssub.s32 6144, 6144
      %29 = vsyncadd [#allocation5], %s28
      %s30 = sshll.u32 [#allocation4], 4
      %s31 = int_to_ptr.vmem [resolvable:$true] %s30
      %36 = dma.hbm_to_vmem [thread:$0]  %s2, 6144, %s31, [#allocation5], 128, 128, 8
    $region13: #{lstm_model_forward.1} parent=1 // pred_fallthru
      _
    // Predicated region
    $region14: #{lstm_model_forward.1} parent=1 // pred_check
      _
    $region15: #{lstm_model_forward.1} parent=1 // pred_check_branch
      %38 = sbr.rel (0) target = $region17
    $region16: #{lstm_model_forward.1} parent=1 // pred_region
      _
    $region17: #{lstm_model_forward.1} parent=1 // pred_fallthru
      _
    // Predicated region
    $region18: #{lstm_model_forward.1} parent=1 // pred_check
      _
    $region19: #{lstm_model_forward.1} parent=1 // pred_check_branch
      %40 = sbr.rel (0) target = $region21
    $region20: #{lstm_model_forward.1} parent=1 // pred_region
      %41 = dma.done [#allocation3], 16384
    $region21: #{lstm_model_forward.1} parent=1 // pred_fallthru
      _
    // Predicated region
    $region22: #{lstm_model_forward.1} parent=1 // pred_check
      _
    $region23: #{lstm_model_forward.1} parent=1 // pred_check_branch
      %43 = sbr.rel (0) target = $region25
    $region24: #{lstm_model_forward.1} parent=1 // pred_region
      %44 = dma.done [#allocation5], 6144
    $region25: #{lstm_model_forward.1} parent=1 // pred_fallthru
      _
    %v45 = vld [vmem:[%s0] sm:$0xff]
    %v46 = vld [vmem:[#allocation2] sm:$0xff]
    %v47 = vld [vmem:[#allocation2 + $0x8] sm:$0xff]
    %v48 = vld [vmem:[#allocation2 + $0x10] sm:$0xff]
    %v49 = vld [vmem:[#allocation2 + $0x18] sm:$0xff]
    %v50 = vld [vmem:[#allocation2 + $0x20] sm:$0xff]
    %v51 = vld [vmem:[#allocation2 + $0x28] sm:$0xff]
    %v52 = vld [vmem:[#allocation2 + $0x30] sm:$0xff]
    %v53 = vld [vmem:[#allocation2 + $0x38] sm:$0xff]
    %v54 = vld [vmem:[#allocation2 + $0x40] sm:$0xff]
    %v55 = vld [vmem:[#allocation2 + $0x48] sm:$0xff]
    %v56 = vld [vmem:[#allocation2 + $0x50] sm:$0xff]
    %v57 = vld [vmem:[#allocation2 + $0x58] sm:$0xff]
    %v58 = vld [vmem:[#allocation2 + $0x60] sm:$0xff]
    %v59 = vld [vmem:[#allocation2 + $0x68] sm:$0xff]
    %v60 = vld [vmem:[#allocation2 + $0x70] sm:$0xff]
    %v61 = vld [vmem:[#allocation2 + $0x78] sm:$0xff]
    %v62 = vld [vmem:[#allocation2 + $0x80] sm:$0xff]
    %v63 = vld [vmem:[#allocation2 + $0x88] sm:$0xff]
    %v64 = vld [vmem:[#allocation2 + $0x90] sm:$0xff]
    %v65 = vld [vmem:[#allocation2 + $0x98] sm:$0xff]
    %v66 = vld [vmem:[#allocation2 + $0xa0] sm:$0xff]
    %v67 = vld [vmem:[#allocation2 + $0xa8] sm:$0xff]
    %v68 = vld [vmem:[#allocation2 + $0xb0] sm:$0xff]
    %v69 = vld [vmem:[#allocation2 + $0xb8] sm:$0xff]
    %v70 = vld [vmem:[#allocation2 + $0xc0] sm:$0xff]
    %v71 = vld [vmem:[#allocation2 + $0xc8] sm:$0xff]
    %v72 = vld [vmem:[#allocation2 + $0xd0] sm:$0xff]
    %v73 = vld [vmem:[#allocation2 + $0xd8] sm:$0xff]
    %v74 = vld [vmem:[#allocation2 + $0xe0] sm:$0xff]
    %v75 = vld [vmem:[#allocation2 + $0xe8] sm:$0xff]
    %v76 = vld [vmem:[#allocation2 + $0xf0] sm:$0xff]
    %v77 = vld [vmem:[#allocation2 + $0xf8] sm:$0xff]
    %v78 = vld [vmem:[#allocation2 + $0x100] sm:$0xff]
    %v79 = vld [vmem:[#allocation2 + $0x108] sm:$0xff]
    %v80 = vld [vmem:[#allocation2 + $0x110] sm:$0xff]
    %v81 = vld [vmem:[#allocation2 + $0x118] sm:$0xff]
    %v82 = vld [vmem:[#allocation2 + $0x120] sm:$0xff]
    %v83 = vld [vmem:[#allocation2 + $0x128] sm:$0xff]
    %v84 = vld [vmem:[#allocation2 + $0x130] sm:$0xff]
    %v85 = vld [vmem:[#allocation2 + $0x138] sm:$0xff]
    %v86 = vld [vmem:[#allocation2 + $0x140] sm:$0xff]
    %v87 = vld [vmem:[#allocation2 + $0x148] sm:$0xff]
    %v88 = vld [vmem:[#allocation2 + $0x150] sm:$0xff]
    %v89 = vld [vmem:[#allocation2 + $0x158] sm:$0xff]
    %v90 = vld [vmem:[#allocation2 + $0x160] sm:$0xff]
    %v91 = vld [vmem:[#allocation2 + $0x168] sm:$0xff]
    %v92 = vld [vmem:[#allocation2 + $0x170] sm:$0xff]
    %v93 = vld [vmem:[#allocation2 + $0x178] sm:$0xff]
    %v94 = vld [vmem:[#allocation2 + $0x180] sm:$0xff]
    %v95 = vld [vmem:[#allocation2 + $0x188] sm:$0xff]
    %v96 = vld [vmem:[#allocation2 + $0x190] sm:$0xff]
    %v97 = vld [vmem:[#allocation2 + $0x198] sm:$0xff]
    %v98 = vld [vmem:[#allocation2 + $0x1a0] sm:$0xff]
    %v99 = vld [vmem:[#allocation2 + $0x1a8] sm:$0xff]
    %v100 = vld [vmem:[#allocation2 + $0x1b0] sm:$0xff]
    %v101 = vld [vmem:[#allocation2 + $0x1b8] sm:$0xff]
    %v102 = vld [vmem:[#allocation2 + $0x1c0] sm:$0xff]
    %v103 = vld [vmem:[#allocation2 + $0x1c8] sm:$0xff]
    %v104 = vld [vmem:[#allocation2 + $0x1d0] sm:$0xff]
    %v105 = vld [vmem:[#allocation2 + $0x1d8] sm:$0xff]
    %v106 = vld [vmem:[#allocation2 + $0x1e0] sm:$0xff]
    %v107 = vld [vmem:[#allocation2 + $0x1e8] sm:$0xff]
    %v108 = vld [vmem:[#allocation2 + $0x1f0] sm:$0xff]
    %v109 = vld [vmem:[#allocation2 + $0x1f8] sm:$0xff]
    %v110 = vld [vmem:[#allocation2 + $0x200] sm:$0xff]
    %v111 = vld [vmem:[#allocation2 + $0x208] sm:$0xff]
    %v112 = vld [vmem:[#allocation2 + $0x210] sm:$0xff]
    %v113 = vld [vmem:[#allocation2 + $0x218] sm:$0xff]
    %v114 = vld [vmem:[#allocation2 + $0x220] sm:$0xff]
    %v115 = vld [vmem:[#allocation2 + $0x228] sm:$0xff]
    %v116 = vld [vmem:[#allocation2 + $0x230] sm:$0xff]
    %v117 = vld [vmem:[#allocation2 + $0x238] sm:$0xff]
    %v118 = vld [vmem:[#allocation2 + $0x240] sm:$0xff]
    %v119 = vld [vmem:[#allocation2 + $0x248] sm:$0xff]
    %v120 = vld [vmem:[#allocation2 + $0x250] sm:$0xff]
    %v121 = vld [vmem:[#allocation2 + $0x258] sm:$0xff]
    %v122 = vld [vmem:[#allocation2 + $0x260] sm:$0xff]
    %v123 = vld [vmem:[#allocation2 + $0x268] sm:$0xff]
    %v124 = vld [vmem:[#allocation2 + $0x270] sm:$0xff]
    %v125 = vld [vmem:[#allocation2 + $0x278] sm:$0xff]
    %v126 = vld [vmem:[#allocation2 + $0x280] sm:$0xff]
    %v127 = vld [vmem:[#allocation2 + $0x288] sm:$0xff]
    %v128 = vld [vmem:[#allocation2 + $0x290] sm:$0xff]
    %v129 = vld [vmem:[#allocation2 + $0x298] sm:$0xff]
    %v130 = vld [vmem:[#allocation2 + $0x2a0] sm:$0xff]
    %v131 = vld [vmem:[#allocation2 + $0x2a8] sm:$0xff]
    %v132 = vld [vmem:[#allocation2 + $0x2b0] sm:$0xff]
    %v133 = vld [vmem:[#allocation2 + $0x2b8] sm:$0xff]
    %v134 = vld [vmem:[#allocation2 + $0x2c0] sm:$0xff]
    %v135 = vld [vmem:[#allocation2 + $0x2c8] sm:$0xff]
    %v136 = vld [vmem:[#allocation2 + $0x2d0] sm:$0xff]
    %v137 = vld [vmem:[#allocation2 + $0x2d8] sm:$0xff]
    %v138 = vld [vmem:[#allocation2 + $0x2e0] sm:$0xff]
    %v139 = vld [vmem:[#allocation2 + $0x2e8] sm:$0xff]
    %v140 = vld [vmem:[#allocation2 + $0x2f0] sm:$0xff]
    %v141 = vld [vmem:[#allocation2 + $0x2f8] sm:$0xff]
    %v142 = vld [vmem:[#allocation2 + $0x300] sm:$0xff]
    %v143 = vld [vmem:[#allocation2 + $0x308] sm:$0xff]
    %v144 = vld [vmem:[#allocation2 + $0x310] sm:$0xff]
    %v145 = vld [vmem:[#allocation2 + $0x318] sm:$0xff]
    %v146 = vld [vmem:[#allocation2 + $0x320] sm:$0xff]
    %v147 = vld [vmem:[#allocation2 + $0x328] sm:$0xff]
    %v148 = vld [vmem:[#allocation2 + $0x330] sm:$0xff]
    %v149 = vld [vmem:[#allocation2 + $0x338] sm:$0xff]
    %v150 = vld [vmem:[#allocation2 + $0x340] sm:$0xff]
    %v151 = vld [vmem:[#allocation2 + $0x348] sm:$0xff]
    %v152 = vld [vmem:[#allocation2 + $0x350] sm:$0xff]
    %v153 = vld [vmem:[#allocation2 + $0x358] sm:$0xff]
    %v154 = vld [vmem:[#allocation2 + $0x360] sm:$0xff]
    %v155 = vld [vmem:[#allocation2 + $0x368] sm:$0xff]
    %v156 = vld [vmem:[#allocation2 + $0x370] sm:$0xff]
    %v157 = vld [vmem:[#allocation2 + $0x378] sm:$0xff]
    %v158 = vld [vmem:[#allocation2 + $0x380] sm:$0xff]
    %v159 = vld [vmem:[#allocation2 + $0x388] sm:$0xff]
    %v160 = vld [vmem:[#allocation2 + $0x390] sm:$0xff]
    %v161 = vld [vmem:[#allocation2 + $0x398] sm:$0xff]
    %v162 = vld [vmem:[#allocation2 + $0x3a0] sm:$0xff]
    %v163 = vld [vmem:[#allocation2 + $0x3a8] sm:$0xff]
    %v164 = vld [vmem:[#allocation2 + $0x3b0] sm:$0xff]
    %v165 = vld [vmem:[#allocation2 + $0x3b8] sm:$0xff]
    %v166 = vld [vmem:[#allocation2 + $0x3c0] sm:$0xff]
    %v167 = vld [vmem:[#allocation2 + $0x3c8] sm:$0xff]
    %v168 = vld [vmem:[#allocation2 + $0x3d0] sm:$0xff]
    %v169 = vld [vmem:[#allocation2 + $0x3d8] sm:$0xff]
    %v170 = vld [vmem:[#allocation2 + $0x3e0] sm:$0xff]
    %v171 = vld [vmem:[#allocation2 + $0x3e8] sm:$0xff]
    %v172 = vld [vmem:[#allocation2 + $0x3f0] sm:$0xff]
    %v173 = vld [vmem:[#allocation2 + $0x3f8] sm:$0xff]
    %174 = vmatprep.subr.mxu0 %v107
    %175 = vmatpush1.msra.mxu0 %v106
    %176 = vmatprep.subr.mxu0 %v103
    %177 = vmatpush1.msra.mxu0 %v102
    %178 = vmatprep.subr.mxu0 %v99
    %179 = vmatpush1.msra.mxu0 %v98
    %180 = vmatprep.subr.mxu0 %v95
    %181 = vmatpush1.msra.mxu0 %v94
    %182 = vmatprep.subr.mxu0 %v91
    %183 = vmatpush1.msra.mxu0 %v90
    %184 = vmatprep.subr.mxu0 %v87
    %185 = vmatpush1.msra.mxu0 %v86
    %186 = vmatprep.subr.mxu0 %v83
    %187 = vmatpush1.msra.mxu0 %v82
    %188 = vmatprep.subr.mxu0 %v79
    %189 = vmatpush1.msra.mxu0 %v78
    %190 = vmatprep.subr.mxu0 %v75
    %191 = vmatpush1.msra.mxu0 %v74
    %192 = vmatprep.subr.mxu0 %v71
    %193 = vmatpush1.msra.mxu0 %v70
    %194 = vmatprep.subr.mxu0 %v67
    %195 = vmatpush1.msra.mxu0 %v66
    %196 = vmatprep.subr.mxu0 %v63
    %197 = vmatpush1.msra.mxu0 %v62
    %198 = vmatprep.subr.mxu0 %v59
    %199 = vmatpush1.msra.mxu0 %v58
    %200 = vmatprep.subr.mxu0 %v55
    %201 = vmatpush1.msra.mxu0 %v54
    %202 = vmatprep.subr.mxu0 %v51
    %203 = vmatpush1.msra.mxu0 %v50
    %204 = vmatprep.subr.mxu0 %v47
    %205 = vmatpush1.msra.mxu0 %v46
    %206 = vmatprep.subr.mxu0 %v171
    %207 = vmatpush2.msra.mxu0 %v170
    %208 = vmatprep.subr.mxu0 %v167
    %209 = vmatpush2.msra.mxu0 %v166
    %210 = vmatprep.subr.mxu0 %v163
    %211 = vmatpush2.msra.mxu0 %v162
    %212 = vmatprep.subr.mxu0 %v159
    %213 = vmatpush2.msra.mxu0 %v158
    %214 = vmatprep.subr.mxu0 %v155
    %215 = vmatpush2.msra.mxu0 %v154
    %216 = vmatprep.subr.mxu0 %v151
    %217 = vmatpush2.msra.mxu0 %v150
    %218 = vmatprep.subr.mxu0 %v147
    %219 = vmatpush2.msra.mxu0 %v146
    %220 = vmatprep.subr.mxu0 %v143
    %221 = vmatpush2.msra.mxu0 %v142
    %222 = vmatprep.subr.mxu0 %v139
    %223 = vmatpush2.msra.mxu0 %v138
    %224 = vmatprep.subr.mxu0 %v135
    %225 = vmatpush2.msra.mxu0 %v134
    %226 = vmatprep.subr.mxu0 %v131
    %227 = vmatpush2.msra.mxu0 %v130
    %228 = vmatprep.subr.mxu0 %v127
    %229 = vmatpush2.msra.mxu0 %v126
    %230 = vmatprep.subr.mxu0 %v123
    %231 = vmatpush2.msra.mxu0 %v122
    %232 = vmatprep.subr.mxu0 %v119
    %233 = vmatpush2.msra.mxu0 %v118
    %234 = vmatprep.subr.mxu0 %v115
    %235 = vmatpush2.msra.mxu0 %v114
    %236 = vmatprep.subr.mxu0 %v111
    %237 = vmatpush2.msra.mxu0 %v110
    %238 = vmatprep.mubr.f32.mxu0 0.0
    %239 = vmatmul.mubr.f32.gmra.mxu0 %v45
    %v240 = vpop.f32.mrf.mxu0
    %v241 = vadd.f32 0.0, %v240
    %v242 = vpop.f32.mrf.mxu0
    %v243 = vadd.f32 0.0, %v242
    %244 = vdwg.mxu0
    %245 = vmatprep.subr.mxu0 %v109
    %246 = vmatpush1.msra.mxu0 %v108
    %247 = vmatprep.subr.mxu0 %v105
    %248 = vmatpush1.msra.mxu0 %v104
    %249 = vmatprep.subr.mxu0 %v101
    %250 = vmatpush1.msra.mxu0 %v100
    %251 = vmatprep.subr.mxu0 %v97
    %252 = vmatpush1.msra.mxu0 %v96
    %253 = vmatprep.subr.mxu0 %v93
    %254 = vmatpush1.msra.mxu0 %v92
    %255 = vmatprep.subr.mxu0 %v89
    %256 = vmatpush1.msra.mxu0 %v88
    %257 = vmatprep.subr.mxu0 %v85
    %258 = vmatpush1.msra.mxu0 %v84
    %259 = vmatprep.subr.mxu0 %v81
    %260 = vmatpush1.msra.mxu0 %v80
    %261 = vmatprep.subr.mxu0 %v77
    %262 = vmatpush1.msra.mxu0 %v76
    %263 = vmatprep.subr.mxu0 %v73
    %264 = vmatpush1.msra.mxu0 %v72
    %265 = vmatprep.subr.mxu0 %v69
    %266 = vmatpush1.msra.mxu0 %v68
    %267 = vmatprep.subr.mxu0 %v65
    %268 = vmatpush1.msra.mxu0 %v64
    %269 = vmatprep.subr.mxu0 %v61
    %270 = vmatpush1.msra.mxu0 %v60
    %271 = vmatprep.subr.mxu0 %v57
    %272 = vmatpush1.msra.mxu0 %v56
    %273 = vmatprep.subr.mxu0 %v53
    %274 = vmatpush1.msra.mxu0 %v52
    %275 = vmatprep.subr.mxu0 %v49
    %276 = vmatpush1.msra.mxu0 %v48
    %277 = vmatprep.subr.mxu0 %v173
    %278 = vmatpush2.msra.mxu0 %v172
    %279 = vmatprep.subr.mxu0 %v169
    %280 = vmatpush2.msra.mxu0 %v168
    %281 = vmatprep.subr.mxu0 %v165
    %282 = vmatpush2.msra.mxu0 %v164
    %283 = vmatprep.subr.mxu0 %v161
    %284 = vmatpush2.msra.mxu0 %v160
    %285 = vmatprep.subr.mxu0 %v157
    %286 = vmatpush2.msra.mxu0 %v156
    %287 = vmatprep.subr.mxu0 %v153
    %288 = vmatpush2.msra.mxu0 %v152
    %289 = vmatprep.subr.mxu0 %v149
    %290 = vmatpush2.msra.mxu0 %v148
    %291 = vmatprep.subr.mxu0 %v145
    %292 = vmatpush2.msra.mxu0 %v144
    %293 = vmatprep.subr.mxu0 %v141
    %294 = vmatpush2.msra.mxu0 %v140
    %295 = vmatprep.subr.mxu0 %v137
    %296 = vmatpush2.msra.mxu0 %v136
    %297 = vmatprep.subr.mxu0 %v133
    %298 = vmatpush2.msra.mxu0 %v132
    %299 = vmatprep.subr.mxu0 %v129
    %300 = vmatpush2.msra.mxu0 %v128
    %301 = vmatprep.subr.mxu0 %v125
    %302 = vmatpush2.msra.mxu0 %v124
    %303 = vmatprep.subr.mxu0 %v121
    %304 = vmatpush2.msra.mxu0 %v120
    %305 = vmatprep.subr.mxu0 %v117
    %306 = vmatpush2.msra.mxu0 %v116
    %307 = vmatprep.subr.mxu0 %v113
    %308 = vmatpush2.msra.mxu0 %v112
    %309 = vmatprep.mubr.f32.mxu0 0.0
    %310 = vmatmul.mubr.f32.gmra.mxu0 %v45
    %v311 = vpop.f32.mrf.mxu0
    %v312 = vadd.f32 0.0, %v311
    %v313 = vpop.f32.mrf.mxu0
    %v314 = vadd.f32 0.0, %v313
    %315 = vdwg.mxu0
    %v316 = vmul.f32 %v241, 0.5
    %v317 = vtanh.pop %v316
    %v318 = vmul.f32 %v317, 0.5
    %v319 = vadd.f32 %v318, 0.5
    %v320 = vmul.f32 %v243, 0.5
    %v321 = vtanh.pop %v320
    %v322 = vmul.f32 %v321, 0.5
    %v323 = vadd.f32 %v322, 0.5
    %v324 = vtanh.pop %v312
    %v325 = vmul.f32 %v314, 0.5
    %v326 = vtanh.pop %v325
    %v327 = vmul.f32 %v326, 0.5
    %v328 = vadd.f32 %v327, 0.5
    %v329 = vmul.f32 %v323, 0.0
    %v330 = vmul.f32 %v319, %v324
    %v331 = vadd.f32 %v329, %v330
    %v332 = vtanh.pop %v331
    %v333 = vmul.f32 %v328, %v332
    %s334 = scalar_lea.vmem %s0, 8
    %v335 = vld [vmem:[%s334] sm:$0xff]
    %336 = vmatprep.subr.mxu0 %v107
    %337 = vmatpush1.msra.mxu0 %v106
    %338 = vmatprep.subr.mxu0 %v103
    %339 = vmatpush1.msra.mxu0 %v102
    %340 = vmatprep.subr.mxu0 %v99
    %341 = vmatpush1.msra.mxu0 %v98
    %342 = vmatprep.subr.mxu0 %v95
    %343 = vmatpush1.msra.mxu0 %v94
    %344 = vmatprep.subr.mxu0 %v91
    %345 = vmatpush1.msra.mxu0 %v90
    %346 = vmatprep.subr.mxu0 %v87
    %347 = vmatpush1.msra.mxu0 %v86
    %348 = vmatprep.subr.mxu0 %v83
    %349 = vmatpush1.msra.mxu0 %v82
    %350 = vmatprep.subr.mxu0 %v79
    %351 = vmatpush1.msra.mxu0 %v78
    %352 = vmatprep.subr.mxu0 %v75
    %353 = vmatpush1.msra.mxu0 %v74
    %354 = vmatprep.subr.mxu0 %v71
    %355 = vmatpush1.msra.mxu0 %v70
    %356 = vmatprep.subr.mxu0 %v67
    %357 = vmatpush1.msra.mxu0 %v66
    %358 = vmatprep.subr.mxu0 %v63
    %359 = vmatpush1.msra.mxu0 %v62
    %360 = vmatprep.subr.mxu0 %v59
    %361 = vmatpush1.msra.mxu0 %v58
    %362 = vmatprep.subr.mxu0 %v55
    %363 = vmatpush1.msra.mxu0 %v54
    %364 = vmatprep.subr.mxu0 %v51
    %365 = vmatpush1.msra.mxu0 %v50
    %366 = vmatprep.subr.mxu0 %v47
    %367 = vmatpush1.msra.mxu0 %v46
    %368 = vmatprep.subr.mxu0 %v171
    %369 = vmatpush2.msra.mxu0 %v170
    %370 = vmatprep.subr.mxu0 %v167
    %371 = vmatpush2.msra.mxu0 %v166
    %372 = vmatprep.subr.mxu0 %v163
    %373 = vmatpush2.msra.mxu0 %v162
    %374 = vmatprep.subr.mxu0 %v159
    %375 = vmatpush2.msra.mxu0 %v158
    %376 = vmatprep.subr.mxu0 %v155
    %377 = vmatpush2.msra.mxu0 %v154
    %378 = vmatprep.subr.mxu0 %v151
    %379 = vmatpush2.msra.mxu0 %v150
    %380 = vmatprep.subr.mxu0 %v147
    %381 = vmatpush2.msra.mxu0 %v146
    %382 = vmatprep.subr.mxu0 %v143
    %383 = vmatpush2.msra.mxu0 %v142
    %384 = vmatprep.subr.mxu0 %v139
    %385 = vmatpush2.msra.mxu0 %v138
    %386 = vmatprep.subr.mxu0 %v135
    %387 = vmatpush2.msra.mxu0 %v134
    %388 = vmatprep.subr.mxu0 %v131
    %389 = vmatpush2.msra.mxu0 %v130
    %390 = vmatprep.subr.mxu0 %v127
    %391 = vmatpush2.msra.mxu0 %v126
    %392 = vmatprep.subr.mxu0 %v123
    %393 = vmatpush2.msra.mxu0 %v122
    %394 = vmatprep.subr.mxu0 %v119
    %395 = vmatpush2.msra.mxu0 %v118
    %396 = vmatprep.subr.mxu0 %v115
    %397 = vmatpush2.msra.mxu0 %v114
    %398 = vmatprep.subr.mxu0 %v111
    %399 = vmatpush2.msra.mxu0 %v110
    %400 = vmatprep.mubr.f32.mxu0 %v333
    %401 = vmatmul.mubr.f32.gmra.mxu0 %v335
    %v402 = vpop.f32.mrf.mxu0
    %v403 = vadd.f32 0.0, %v402
    %v404 = vpop.f32.mrf.mxu0
    %v405 = vadd.f32 0.0, %v404
    %406 = vdwg.mxu0
    %407 = vmatprep.subr.mxu0 %v109
    %408 = vmatpush1.msra.mxu0 %v108
    %409 = vmatprep.subr.mxu0 %v105
    %410 = vmatpush1.msra.mxu0 %v104
    %411 = vmatprep.subr.mxu0 %v101
    %412 = vmatpush1.msra.mxu0 %v100
    %413 = vmatprep.subr.mxu0 %v97
    %414 = vmatpush1.msra.mxu0 %v96
    %415 = vmatprep.subr.mxu0 %v93
    %416 = vmatpush1.msra.mxu0 %v92
    %417 = vmatprep.subr.mxu0 %v89
    %418 = vmatpush1.msra.mxu0 %v88
    %419 = vmatprep.subr.mxu0 %v85
    %420 = vmatpush1.msra.mxu0 %v84
    %421 = vmatprep.subr.mxu0 %v81
    %422 = vmatpush1.msra.mxu0 %v80
    %423 = vmatprep.subr.mxu0 %v77
    %424 = vmatpush1.msra.mxu0 %v76
    %425 = vmatprep.subr.mxu0 %v73
    %426 = vmatpush1.msra.mxu0 %v72
    %427 = vmatprep.subr.mxu0 %v69
    %428 = vmatpush1.msra.mxu0 %v68
    %429 = vmatprep.subr.mxu0 %v65
    %430 = vmatpush1.msra.mxu0 %v64
    %431 = vmatprep.subr.mxu0 %v61
    %432 = vmatpush1.msra.mxu0 %v60
    %433 = vmatprep.subr.mxu0 %v57
    %434 = vmatpush1.msra.mxu0 %v56
    %435 = vmatprep.subr.mxu0 %v53
    %436 = vmatpush1.msra.mxu0 %v52
    %437 = vmatprep.subr.mxu0 %v49
    %438 = vmatpush1.msra.mxu0 %v48
    %439 = vmatprep.subr.mxu0 %v173
    %440 = vmatpush2.msra.mxu0 %v172
    %441 = vmatprep.subr.mxu0 %v169
    %442 = vmatpush2.msra.mxu0 %v168
    %443 = vmatprep.subr.mxu0 %v165
    %444 = vmatpush2.msra.mxu0 %v164
    %445 = vmatprep.subr.mxu0 %v161
    %446 = vmatpush2.msra.mxu0 %v160
    %447 = vmatprep.subr.mxu0 %v157
    %448 = vmatpush2.msra.mxu0 %v156
    %449 = vmatprep.subr.mxu0 %v153
    %450 = vmatpush2.msra.mxu0 %v152
    %451 = vmatprep.subr.mxu0 %v149
    %452 = vmatpush2.msra.mxu0 %v148
    %453 = vmatprep.subr.mxu0 %v145
    %454 = vmatpush2.msra.mxu0 %v144
    %455 = vmatprep.subr.mxu0 %v141
    %456 = vmatpush2.msra.mxu0 %v140
    %457 = vmatprep.subr.mxu0 %v137
    %458 = vmatpush2.msra.mxu0 %v136
    %459 = vmatprep.subr.mxu0 %v133
    %460 = vmatpush2.msra.mxu0 %v132
    %461 = vmatprep.subr.mxu0 %v129
    %462 = vmatpush2.msra.mxu0 %v128
    %463 = vmatprep.subr.mxu0 %v125
    %464 = vmatpush2.msra.mxu0 %v124
    %465 = vmatprep.subr.mxu0 %v121
    %466 = vmatpush2.msra.mxu0 %v120
    %467 = vmatprep.subr.mxu0 %v117
    %468 = vmatpush2.msra.mxu0 %v116
    %469 = vmatprep.subr.mxu0 %v113
    %470 = vmatpush2.msra.mxu0 %v112
    %471 = vmatprep.mubr.f32.mxu0 %v333
    %472 = vmatmul.mubr.f32.gmra.mxu0 %v335
    %v473 = vpop.f32.mrf.mxu0
    %v474 = vadd.f32 0.0, %v473
    %v475 = vpop.f32.mrf.mxu0
    %v476 = vadd.f32 0.0, %v475
    %477 = vdwg.mxu0
    %v478 = vmul.f32 %v403, 0.5
    %v479 = vtanh.pop %v478
    %v480 = vmul.f32 %v479, 0.5
    %v481 = vadd.f32 %v480, 0.5
    %v482 = vmul.f32 %v405, 0.5
    %v483 = vtanh.pop %v482
    %v484 = vmul.f32 %v483, 0.5
    %v485 = vadd.f32 %v484, 0.5
    %v486 = vtanh.pop %v474
    %v487 = vmul.f32 %v476, 0.5
    %v488 = vtanh.pop %v487
    %v489 = vmul.f32 %v488, 0.5
    %v490 = vadd.f32 %v489, 0.5
    %v491 = vmul.f32 %v485, %v331
    %v492 = vmul.f32 %v481, %v486
    %v493 = vadd.f32 %v491, %v492
    %v494 = vtanh.pop %v493
    %v495 = vmul.f32 %v490, %v494
    %s496 = scalar_lea.vmem %s0, 16
    %v497 = vld [vmem:[%s496] sm:$0xff]
    %498 = vmatprep.subr.mxu0 %v107
    %499 = vmatpush1.msra.mxu0 %v106
    %500 = vmatprep.subr.mxu0 %v103
    %501 = vmatpush1.msra.mxu0 %v102
    %502 = vmatprep.subr.mxu0 %v99
    %503 = vmatpush1.msra.mxu0 %v98
    %504 = vmatprep.subr.mxu0 %v95
    %505 = vmatpush1.msra.mxu0 %v94
    %506 = vmatprep.subr.mxu0 %v91
    %507 = vmatpush1.msra.mxu0 %v90
    %508 = vmatprep.subr.mxu0 %v87
    %509 = vmatpush1.msra.mxu0 %v86
    %510 = vmatprep.subr.mxu0 %v83
    %511 = vmatpush1.msra.mxu0 %v82
    %512 = vmatprep.subr.mxu0 %v79
    %513 = vmatpush1.msra.mxu0 %v78
    %514 = vmatprep.subr.mxu0 %v75
    %515 = vmatpush1.msra.mxu0 %v74
    %516 = vmatprep.subr.mxu0 %v71
    %517 = vmatpush1.msra.mxu0 %v70
    %518 = vmatprep.subr.mxu0 %v67
    %519 = vmatpush1.msra.mxu0 %v66
    %520 = vmatprep.subr.mxu0 %v63
    %521 = vmatpush1.msra.mxu0 %v62
    %522 = vmatprep.subr.mxu0 %v59
    %523 = vmatpush1.msra.mxu0 %v58
    %524 = vmatprep.subr.mxu0 %v55
    %525 = vmatpush1.msra.mxu0 %v54
    %526 = vmatprep.subr.mxu0 %v51
    %527 = vmatpush1.msra.mxu0 %v50
    %528 = vmatprep.subr.mxu0 %v47
    %529 = vmatpush1.msra.mxu0 %v46
    %530 = vmatprep.subr.mxu0 %v171
    %531 = vmatpush2.msra.mxu0 %v170
    %532 = vmatprep.subr.mxu0 %v167
    %533 = vmatpush2.msra.mxu0 %v166
    %534 = vmatprep.subr.mxu0 %v163
    %535 = vmatpush2.msra.mxu0 %v162
    %536 = vmatprep.subr.mxu0 %v159
    %537 = vmatpush2.msra.mxu0 %v158
    %538 = vmatprep.subr.mxu0 %v155
    %539 = vmatpush2.msra.mxu0 %v154
    %540 = vmatprep.subr.mxu0 %v151
    %541 = vmatpush2.msra.mxu0 %v150
    %542 = vmatprep.subr.mxu0 %v147
    %543 = vmatpush2.msra.mxu0 %v146
    %544 = vmatprep.subr.mxu0 %v143
    %545 = vmatpush2.msra.mxu0 %v142
    %546 = vmatprep.subr.mxu0 %v139
    %547 = vmatpush2.msra.mxu0 %v138
    %548 = vmatprep.subr.mxu0 %v135
    %549 = vmatpush2.msra.mxu0 %v134
    %550 = vmatprep.subr.mxu0 %v131
    %551 = vmatpush2.msra.mxu0 %v130
    %552 = vmatprep.subr.mxu0 %v127
    %553 = vmatpush2.msra.mxu0 %v126
    %554 = vmatprep.subr.mxu0 %v123
    %555 = vmatpush2.msra.mxu0 %v122
    %556 = vmatprep.subr.mxu0 %v119
    %557 = vmatpush2.msra.mxu0 %v118
    %558 = vmatprep.subr.mxu0 %v115
    %559 = vmatpush2.msra.mxu0 %v114
    %560 = vmatprep.subr.mxu0 %v111
    %561 = vmatpush2.msra.mxu0 %v110
    %562 = vmatprep.mubr.f32.mxu0 %v495
    %563 = vmatmul.mubr.f32.gmra.mxu0 %v497
    %v564 = vpop.f32.mrf.mxu0
    %v565 = vadd.f32 0.0, %v564
    %v566 = vpop.f32.mrf.mxu0
    %v567 = vadd.f32 0.0, %v566
    %568 = vdwg.mxu0
    %569 = vmatprep.subr.mxu0 %v109
    %570 = vmatpush1.msra.mxu0 %v108
    %571 = vmatprep.subr.mxu0 %v105
    %572 = vmatpush1.msra.mxu0 %v104
    %573 = vmatprep.subr.mxu0 %v101
    %574 = vmatpush1.msra.mxu0 %v100
    %575 = vmatprep.subr.mxu0 %v97
    %576 = vmatpush1.msra.mxu0 %v96
    %577 = vmatprep.subr.mxu0 %v93
    %578 = vmatpush1.msra.mxu0 %v92
    %579 = vmatprep.subr.mxu0 %v89
    %580 = vmatpush1.msra.mxu0 %v88
    %581 = vmatprep.subr.mxu0 %v85
    %582 = vmatpush1.msra.mxu0 %v84
    %583 = vmatprep.subr.mxu0 %v81
    %584 = vmatpush1.msra.mxu0 %v80
    %585 = vmatprep.subr.mxu0 %v77
    %586 = vmatpush1.msra.mxu0 %v76
    %587 = vmatprep.subr.mxu0 %v73
    %588 = vmatpush1.msra.mxu0 %v72
    %589 = vmatprep.subr.mxu0 %v69
    %590 = vmatpush1.msra.mxu0 %v68
    %591 = vmatprep.subr.mxu0 %v65
    %592 = vmatpush1.msra.mxu0 %v64
    %593 = vmatprep.subr.mxu0 %v61
    %594 = vmatpush1.msra.mxu0 %v60
    %595 = vmatprep.subr.mxu0 %v57
    %596 = vmatpush1.msra.mxu0 %v56
    %597 = vmatprep.subr.mxu0 %v53
    %598 = vmatpush1.msra.mxu0 %v52
    %599 = vmatprep.subr.mxu0 %v49
    %600 = vmatpush1.msra.mxu0 %v48
    %601 = vmatprep.subr.mxu0 %v173
    %602 = vmatpush2.msra.mxu0 %v172
    %603 = vmatprep.subr.mxu0 %v169
    %604 = vmatpush2.msra.mxu0 %v168
    %605 = vmatprep.subr.mxu0 %v165
    %606 = vmatpush2.msra.mxu0 %v164
    %607 = vmatprep.subr.mxu0 %v161
    %608 = vmatpush2.msra.mxu0 %v160
    %609 = vmatprep.subr.mxu0 %v157
    %610 = vmatpush2.msra.mxu0 %v156
    %611 = vmatprep.subr.mxu0 %v153
    %612 = vmatpush2.msra.mxu0 %v152
    %613 = vmatprep.subr.mxu0 %v149
    %614 = vmatpush2.msra.mxu0 %v148
    %615 = vmatprep.subr.mxu0 %v145
    %616 = vmatpush2.msra.mxu0 %v144
    %617 = vmatprep.subr.mxu0 %v141
    %618 = vmatpush2.msra.mxu0 %v140
    %619 = vmatprep.subr.mxu0 %v137
    %620 = vmatpush2.msra.mxu0 %v136
    %621 = vmatprep.subr.mxu0 %v133
    %622 = vmatpush2.msra.mxu0 %v132
    %623 = vmatprep.subr.mxu0 %v129
    %624 = vmatpush2.msra.mxu0 %v128
    %625 = vmatprep.subr.mxu0 %v125
    %626 = vmatpush2.msra.mxu0 %v124
    %627 = vmatprep.subr.mxu0 %v121
    %628 = vmatpush2.msra.mxu0 %v120
    %629 = vmatprep.subr.mxu0 %v117
    %630 = vmatpush2.msra.mxu0 %v116
    %631 = vmatprep.subr.mxu0 %v113
    %632 = vmatpush2.msra.mxu0 %v112
    %633 = vmatprep.mubr.f32.mxu0 %v495
    %634 = vmatmul.mubr.f32.gmra.mxu0 %v497
    %v635 = vpop.f32.mrf.mxu0
    %v636 = vadd.f32 0.0, %v635
    %v637 = vpop.f32.mrf.mxu0
    %v638 = vadd.f32 0.0, %v637
    %639 = vdwg.mxu0
    %v640 = vmul.f32 %v565, 0.5
    %v641 = vtanh.pop %v640
    %v642 = vmul.f32 %v641, 0.5
    %v643 = vadd.f32 %v642, 0.5
    %v644 = vmul.f32 %v567, 0.5
    %v645 = vtanh.pop %v644
    %v646 = vmul.f32 %v645, 0.5
    %v647 = vadd.f32 %v646, 0.5
    %v648 = vtanh.pop %v636
    %v649 = vmul.f32 %v638, 0.5
    %v650 = vtanh.pop %v649
    %v651 = vmul.f32 %v650, 0.5
    %v652 = vadd.f32 %v651, 0.5
    %v653 = vmul.f32 %v647, %v493
    %v654 = vmul.f32 %v643, %v648
    %v655 = vadd.f32 %v653, %v654
    %v656 = vtanh.pop %v655
    %v657 = vmul.f32 %v652, %v656
    %s658 = scalar_lea.vmem %s0, 24
    %v659 = vld [vmem:[%s658] sm:$0xff]
    %660 = vmatprep.subr.mxu0 %v107
    %661 = vmatpush1.msra.mxu0 %v106
    %662 = vmatprep.subr.mxu0 %v103
    %663 = vmatpush1.msra.mxu0 %v102
    %664 = vmatprep.subr.mxu0 %v99
    %665 = vmatpush1.msra.mxu0 %v98
    %666 = vmatprep.subr.mxu0 %v95
    %667 = vmatpush1.msra.mxu0 %v94
    %668 = vmatprep.subr.mxu0 %v91
    %669 = vmatpush1.msra.mxu0 %v90
    %670 = vmatprep.subr.mxu0 %v87
    %671 = vmatpush1.msra.mxu0 %v86
    %672 = vmatprep.subr.mxu0 %v83
    %673 = vmatpush1.msra.mxu0 %v82
    %674 = vmatprep.subr.mxu0 %v79
    %675 = vmatpush1.msra.mxu0 %v78
    %676 = vmatprep.subr.mxu0 %v75
    %677 = vmatpush1.msra.mxu0 %v74
    %678 = vmatprep.subr.mxu0 %v71
    %679 = vmatpush1.msra.mxu0 %v70
    %680 = vmatprep.subr.mxu0 %v67
    %681 = vmatpush1.msra.mxu0 %v66
    %682 = vmatprep.subr.mxu0 %v63
    %683 = vmatpush1.msra.mxu0 %v62
    %684 = vmatprep.subr.mxu0 %v59
    %685 = vmatpush1.msra.mxu0 %v58
    %686 = vmatprep.subr.mxu0 %v55
    %687 = vmatpush1.msra.mxu0 %v54
    %688 = vmatprep.subr.mxu0 %v51
    %689 = vmatpush1.msra.mxu0 %v50
    %690 = vmatprep.subr.mxu0 %v47
    %691 = vmatpush1.msra.mxu0 %v46
    %692 = vmatprep.subr.mxu0 %v171
    %693 = vmatpush2.msra.mxu0 %v170
    %694 = vmatprep.subr.mxu0 %v167
    %695 = vmatpush2.msra.mxu0 %v166
    %696 = vmatprep.subr.mxu0 %v163
    %697 = vmatpush2.msra.mxu0 %v162
    %698 = vmatprep.subr.mxu0 %v159
    %699 = vmatpush2.msra.mxu0 %v158
    %700 = vmatprep.subr.mxu0 %v155
    %701 = vmatpush2.msra.mxu0 %v154
    %702 = vmatprep.subr.mxu0 %v151
    %703 = vmatpush2.msra.mxu0 %v150
    %704 = vmatprep.subr.mxu0 %v147
    %705 = vmatpush2.msra.mxu0 %v146
    %706 = vmatprep.subr.mxu0 %v143
    %707 = vmatpush2.msra.mxu0 %v142
    %708 = vmatprep.subr.mxu0 %v139
    %709 = vmatpush2.msra.mxu0 %v138
    %710 = vmatprep.subr.mxu0 %v135
    %711 = vmatpush2.msra.mxu0 %v134
    %712 = vmatprep.subr.mxu0 %v131
    %713 = vmatpush2.msra.mxu0 %v130
    %714 = vmatprep.subr.mxu0 %v127
    %715 = vmatpush2.msra.mxu0 %v126
    %716 = vmatprep.subr.mxu0 %v123
    %717 = vmatpush2.msra.mxu0 %v122
    %718 = vmatprep.subr.mxu0 %v119
    %719 = vmatpush2.msra.mxu0 %v118
    %720 = vmatprep.subr.mxu0 %v115
    %721 = vmatpush2.msra.mxu0 %v114
    %722 = vmatprep.subr.mxu0 %v111
    %723 = vmatpush2.msra.mxu0 %v110
    %724 = vmatprep.mubr.f32.mxu0 %v657
    %725 = vmatmul.mubr.f32.gmra.mxu0 %v659
    %v726 = vpop.f32.mrf.mxu0
    %v727 = vadd.f32 0.0, %v726
    %v728 = vpop.f32.mrf.mxu0
    %v729 = vadd.f32 0.0, %v728
    %730 = vdwg.mxu0
    %731 = vmatprep.subr.mxu0 %v109
    %732 = vmatpush1.msra.mxu0 %v108
    %733 = vmatprep.subr.mxu0 %v105
    %734 = vmatpush1.msra.mxu0 %v104
    %735 = vmatprep.subr.mxu0 %v101
    %736 = vmatpush1.msra.mxu0 %v100
    %737 = vmatprep.subr.mxu0 %v97
    %738 = vmatpush1.msra.mxu0 %v96
    %739 = vmatprep.subr.mxu0 %v93
    %740 = vmatpush1.msra.mxu0 %v92
    %741 = vmatprep.subr.mxu0 %v89
    %742 = vmatpush1.msra.mxu0 %v88
    %743 = vmatprep.subr.mxu0 %v85
    %744 = vmatpush1.msra.mxu0 %v84
    %745 = vmatprep.subr.mxu0 %v81
    %746 = vmatpush1.msra.mxu0 %v80
    %747 = vmatprep.subr.mxu0 %v77
    %748 = vmatpush1.msra.mxu0 %v76
    %749 = vmatprep.subr.mxu0 %v73
    %750 = vmatpush1.msra.mxu0 %v72
    %751 = vmatprep.subr.mxu0 %v69
    %752 = vmatpush1.msra.mxu0 %v68
    %753 = vmatprep.subr.mxu0 %v65
    %754 = vmatpush1.msra.mxu0 %v64
    %755 = vmatprep.subr.mxu0 %v61
    %756 = vmatpush1.msra.mxu0 %v60
    %757 = vmatprep.subr.mxu0 %v57
    %758 = vmatpush1.msra.mxu0 %v56
    %759 = vmatprep.subr.mxu0 %v53
    %760 = vmatpush1.msra.mxu0 %v52
    %761 = vmatprep.subr.mxu0 %v49
    %762 = vmatpush1.msra.mxu0 %v48
    %763 = vmatprep.subr.mxu0 %v173
    %764 = vmatpush2.msra.mxu0 %v172
    %765 = vmatprep.subr.mxu0 %v169
    %766 = vmatpush2.msra.mxu0 %v168
    %767 = vmatprep.subr.mxu0 %v165
    %768 = vmatpush2.msra.mxu0 %v164
    %769 = vmatprep.subr.mxu0 %v161
    %770 = vmatpush2.msra.mxu0 %v160
    %771 = vmatprep.subr.mxu0 %v157
    %772 = vmatpush2.msra.mxu0 %v156
    %773 = vmatprep.subr.mxu0 %v153
    %774 = vmatpush2.msra.mxu0 %v152
    %775 = vmatprep.subr.mxu0 %v149
    %776 = vmatpush2.msra.mxu0 %v148
    %777 = vmatprep.subr.mxu0 %v145
    %778 = vmatpush2.msra.mxu0 %v144
    %779 = vmatprep.subr.mxu0 %v141
    %780 = vmatpush2.msra.mxu0 %v140
    %781 = vmatprep.subr.mxu0 %v137
    %782 = vmatpush2.msra.mxu0 %v136
    %783 = vmatprep.subr.mxu0 %v133
    %784 = vmatpush2.msra.mxu0 %v132
    %785 = vmatprep.subr.mxu0 %v129
    %786 = vmatpush2.msra.mxu0 %v128
    %787 = vmatprep.subr.mxu0 %v125
    %788 = vmatpush2.msra.mxu0 %v124
    %789 = vmatprep.subr.mxu0 %v121
    %790 = vmatpush2.msra.mxu0 %v120
    %791 = vmatprep.subr.mxu0 %v117
    %792 = vmatpush2.msra.mxu0 %v116
    %793 = vmatprep.subr.mxu0 %v113
    %794 = vmatpush2.msra.mxu0 %v112
    %795 = vmatprep.mubr.f32.mxu0 %v657
    %796 = vmatmul.mubr.f32.gmra.mxu0 %v659
    %v797 = vpop.f32.mrf.mxu0
    %v798 = vadd.f32 0.0, %v797
    %v799 = vpop.f32.mrf.mxu0
    %v800 = vadd.f32 0.0, %v799
    %801 = vdwg.mxu0
    %v802 = vmul.f32 %v727, 0.5
    %v803 = vtanh.pop %v802
    %v804 = vmul.f32 %v803, 0.5
    %v805 = vadd.f32 %v804, 0.5
    %v806 = vmul.f32 %v729, 0.5
    %v807 = vtanh.pop %v806
    %v808 = vmul.f32 %v807, 0.5
    %v809 = vadd.f32 %v808, 0.5
    %v810 = vtanh.pop %v798
    %v811 = vmul.f32 %v800, 0.5
    %v812 = vtanh.pop %v811
    %v813 = vmul.f32 %v812, 0.5
    %v814 = vadd.f32 %v813, 0.5
    %v815 = vmul.f32 %v809, %v655
    %v816 = vmul.f32 %v805, %v810
    %v817 = vadd.f32 %v815, %v816
    %v818 = vtanh.pop %v817
    %v819 = vmul.f32 %v814, %v818
    %s820 = scalar_lea.vmem %s0, 32
    %v821 = vld [vmem:[%s820] sm:$0xff]
    %822 = vmatprep.subr.mxu0 %v107
    %823 = vmatpush1.msra.mxu0 %v106
    %824 = vmatprep.subr.mxu0 %v103
    %825 = vmatpush1.msra.mxu0 %v102
    %826 = vmatprep.subr.mxu0 %v99
    %827 = vmatpush1.msra.mxu0 %v98
    %828 = vmatprep.subr.mxu0 %v95
    %829 = vmatpush1.msra.mxu0 %v94
    %830 = vmatprep.subr.mxu0 %v91
    %831 = vmatpush1.msra.mxu0 %v90
    %832 = vmatprep.subr.mxu0 %v87
    %833 = vmatpush1.msra.mxu0 %v86
    %834 = vmatprep.subr.mxu0 %v83
    %835 = vmatpush1.msra.mxu0 %v82
    %836 = vmatprep.subr.mxu0 %v79
    %837 = vmatpush1.msra.mxu0 %v78
    %838 = vmatprep.subr.mxu0 %v75
    %839 = vmatpush1.msra.mxu0 %v74
    %840 = vmatprep.subr.mxu0 %v71
    %841 = vmatpush1.msra.mxu0 %v70
    %842 = vmatprep.subr.mxu0 %v67
    %843 = vmatpush1.msra.mxu0 %v66
    %844 = vmatprep.subr.mxu0 %v63
    %845 = vmatpush1.msra.mxu0 %v62
    %846 = vmatprep.subr.mxu0 %v59
    %847 = vmatpush1.msra.mxu0 %v58
    %848 = vmatprep.subr.mxu0 %v55
    %849 = vmatpush1.msra.mxu0 %v54
    %850 = vmatprep.subr.mxu0 %v51
    %851 = vmatpush1.msra.mxu0 %v50
    %852 = vmatprep.subr.mxu0 %v47
    %853 = vmatpush1.msra.mxu0 %v46
    %854 = vmatprep.subr.mxu0 %v171
    %855 = vmatpush2.msra.mxu0 %v170
    %856 = vmatprep.subr.mxu0 %v167
    %857 = vmatpush2.msra.mxu0 %v166
    %858 = vmatprep.subr.mxu0 %v163
    %859 = vmatpush2.msra.mxu0 %v162
    %860 = vmatprep.subr.mxu0 %v159
    %861 = vmatpush2.msra.mxu0 %v158
    %862 = vmatprep.subr.mxu0 %v155
    %863 = vmatpush2.msra.mxu0 %v154
    %864 = vmatprep.subr.mxu0 %v151
    %865 = vmatpush2.msra.mxu0 %v150
    %866 = vmatprep.subr.mxu0 %v147
    %867 = vmatpush2.msra.mxu0 %v146
    %868 = vmatprep.subr.mxu0 %v143
    %869 = vmatpush2.msra.mxu0 %v142
    %870 = vmatprep.subr.mxu0 %v139
    %871 = vmatpush2.msra.mxu0 %v138
    %872 = vmatprep.subr.mxu0 %v135
    %873 = vmatpush2.msra.mxu0 %v134
    %874 = vmatprep.subr.mxu0 %v131
    %875 = vmatpush2.msra.mxu0 %v130
    %876 = vmatprep.subr.mxu0 %v127
    %877 = vmatpush2.msra.mxu0 %v126
    %878 = vmatprep.subr.mxu0 %v123
    %879 = vmatpush2.msra.mxu0 %v122
    %880 = vmatprep.subr.mxu0 %v119
    %881 = vmatpush2.msra.mxu0 %v118
    %882 = vmatprep.subr.mxu0 %v115
    %883 = vmatpush2.msra.mxu0 %v114
    %884 = vmatprep.subr.mxu0 %v111
    %885 = vmatpush2.msra.mxu0 %v110
    %886 = vmatprep.mubr.f32.mxu0 %v819
    %887 = vmatmul.mubr.f32.gmra.mxu0 %v821
    %v888 = vpop.f32.mrf.mxu0
    %v889 = vadd.f32 0.0, %v888
    %v890 = vpop.f32.mrf.mxu0
    %v891 = vadd.f32 0.0, %v890
    %892 = vdwg.mxu0
    %893 = vmatprep.subr.mxu0 %v109
    %894 = vmatpush1.msra.mxu0 %v108
    %895 = vmatprep.subr.mxu0 %v105
    %896 = vmatpush1.msra.mxu0 %v104
    %897 = vmatprep.subr.mxu0 %v101
    %898 = vmatpush1.msra.mxu0 %v100
    %899 = vmatprep.subr.mxu0 %v97
    %900 = vmatpush1.msra.mxu0 %v96
    %901 = vmatprep.subr.mxu0 %v93
    %902 = vmatpush1.msra.mxu0 %v92
    %903 = vmatprep.subr.mxu0 %v89
    %904 = vmatpush1.msra.mxu0 %v88
    %905 = vmatprep.subr.mxu0 %v85
    %906 = vmatpush1.msra.mxu0 %v84
    %907 = vmatprep.subr.mxu0 %v81
    %908 = vmatpush1.msra.mxu0 %v80
    %909 = vmatprep.subr.mxu0 %v77
    %910 = vmatpush1.msra.mxu0 %v76
    %911 = vmatprep.subr.mxu0 %v73
    %912 = vmatpush1.msra.mxu0 %v72
    %913 = vmatprep.subr.mxu0 %v69
    %914 = vmatpush1.msra.mxu0 %v68
    %915 = vmatprep.subr.mxu0 %v65
    %916 = vmatpush1.msra.mxu0 %v64
    %917 = vmatprep.subr.mxu0 %v61
    %918 = vmatpush1.msra.mxu0 %v60
    %919 = vmatprep.subr.mxu0 %v57
    %920 = vmatpush1.msra.mxu0 %v56
    %921 = vmatprep.subr.mxu0 %v53
    %922 = vmatpush1.msra.mxu0 %v52
    %923 = vmatprep.subr.mxu0 %v49
    %924 = vmatpush1.msra.mxu0 %v48
    %925 = vmatprep.subr.mxu0 %v173
    %926 = vmatpush2.msra.mxu0 %v172
    %927 = vmatprep.subr.mxu0 %v169
    %928 = vmatpush2.msra.mxu0 %v168
    %929 = vmatprep.subr.mxu0 %v165
    %930 = vmatpush2.msra.mxu0 %v164
    %931 = vmatprep.subr.mxu0 %v161
    %932 = vmatpush2.msra.mxu0 %v160
    %933 = vmatprep.subr.mxu0 %v157
    %934 = vmatpush2.msra.mxu0 %v156
    %935 = vmatprep.subr.mxu0 %v153
    %936 = vmatpush2.msra.mxu0 %v152
    %937 = vmatprep.subr.mxu0 %v149
    %938 = vmatpush2.msra.mxu0 %v148
    %939 = vmatprep.subr.mxu0 %v145
    %940 = vmatpush2.msra.mxu0 %v144
    %941 = vmatprep.subr.mxu0 %v141
    %942 = vmatpush2.msra.mxu0 %v140
    %943 = vmatprep.subr.mxu0 %v137
    %944 = vmatpush2.msra.mxu0 %v136
    %945 = vmatprep.subr.mxu0 %v133
    %946 = vmatpush2.msra.mxu0 %v132
    %947 = vmatprep.subr.mxu0 %v129
    %948 = vmatpush2.msra.mxu0 %v128
    %949 = vmatprep.subr.mxu0 %v125
    %950 = vmatpush2.msra.mxu0 %v124
    %951 = vmatprep.subr.mxu0 %v121
    %952 = vmatpush2.msra.mxu0 %v120
    %953 = vmatprep.subr.mxu0 %v117
    %954 = vmatpush2.msra.mxu0 %v116
    %955 = vmatprep.subr.mxu0 %v113
    %956 = vmatpush2.msra.mxu0 %v112
    %957 = vmatprep.mubr.f32.mxu0 %v819
    %958 = vmatmul.mubr.f32.gmra.mxu0 %v821
    %v959 = vpop.f32.mrf.mxu0
    %v960 = vadd.f32 0.0, %v959
    %v961 = vpop.f32.mrf.mxu0
    %v962 = vadd.f32 0.0, %v961
    %963 = vdwg.mxu0
    %v964 = vmul.f32 %v889, 0.5
    %v965 = vtanh.pop %v964
    %v966 = vmul.f32 %v965, 0.5
    %v967 = vadd.f32 %v966, 0.5
    %v968 = vmul.f32 %v891, 0.5
    %v969 = vtanh.pop %v968
    %v970 = vmul.f32 %v969, 0.5
    %v971 = vadd.f32 %v970, 0.5
    %v972 = vtanh.pop %v960
    %v973 = vmul.f32 %v962, 0.5
    %v974 = vtanh.pop %v973
    %v975 = vmul.f32 %v974, 0.5
    %v976 = vadd.f32 %v975, 0.5
    %v977 = vmul.f32 %v971, %v817
    %v978 = vmul.f32 %v967, %v972
    %v979 = vadd.f32 %v977, %v978
    %v980 = vtanh.pop %v979
    %v981 = vmul.f32 %v976, %v980
    %s982 = scalar_lea.vmem %s0, 40
    %v983 = vld [vmem:[%s982] sm:$0xff]
    %984 = vmatprep.subr.mxu0 %v107
    %985 = vmatpush1.msra.mxu0 %v106
    %986 = vmatprep.subr.mxu0 %v103
    %987 = vmatpush1.msra.mxu0 %v102
    %988 = vmatprep.subr.mxu0 %v99
    %989 = vmatpush1.msra.mxu0 %v98
    %990 = vmatprep.subr.mxu0 %v95
    %991 = vmatpush1.msra.mxu0 %v94
    %992 = vmatprep.subr.mxu0 %v91
    %993 = vmatpush1.msra.mxu0 %v90
    %994 = vmatprep.subr.mxu0 %v87
    %995 = vmatpush1.msra.mxu0 %v86
    %996 = vmatprep.subr.mxu0 %v83
    %997 = vmatpush1.msra.mxu0 %v82
    %998 = vmatprep.subr.mxu0 %v79
    %999 = vmatpush1.msra.mxu0 %v78
    %1000 = vmatprep.subr.mxu0 %v75
    %1001 = vmatpush1.msra.mxu0 %v74
    %1002 = vmatprep.subr.mxu0 %v71
    %1003 = vmatpush1.msra.mxu0 %v70
    %1004 = vmatprep.subr.mxu0 %v67
    %1005 = vmatpush1.msra.mxu0 %v66
    %1006 = vmatprep.subr.mxu0 %v63
    %1007 = vmatpush1.msra.mxu0 %v62
    %1008 = vmatprep.subr.mxu0 %v59
    %1009 = vmatpush1.msra.mxu0 %v58
    %1010 = vmatprep.subr.mxu0 %v55
    %1011 = vmatpush1.msra.mxu0 %v54
    %1012 = vmatprep.subr.mxu0 %v51
    %1013 = vmatpush1.msra.mxu0 %v50
    %1014 = vmatprep.subr.mxu0 %v47
    %1015 = vmatpush1.msra.mxu0 %v46
    %1016 = vmatprep.subr.mxu0 %v171
    %1017 = vmatpush2.msra.mxu0 %v170
    %1018 = vmatprep.subr.mxu0 %v167
    %1019 = vmatpush2.msra.mxu0 %v166
    %1020 = vmatprep.subr.mxu0 %v163
    %1021 = vmatpush2.msra.mxu0 %v162
    %1022 = vmatprep.subr.mxu0 %v159
    %1023 = vmatpush2.msra.mxu0 %v158
    %1024 = vmatprep.subr.mxu0 %v155
    %1025 = vmatpush2.msra.mxu0 %v154
    %1026 = vmatprep.subr.mxu0 %v151
    %1027 = vmatpush2.msra.mxu0 %v150
    %1028 = vmatprep.subr.mxu0 %v147
    %1029 = vmatpush2.msra.mxu0 %v146
    %1030 = vmatprep.subr.mxu0 %v143
    %1031 = vmatpush2.msra.mxu0 %v142
    %1032 = vmatprep.subr.mxu0 %v139
    %1033 = vmatpush2.msra.mxu0 %v138
    %1034 = vmatprep.subr.mxu0 %v135
    %1035 = vmatpush2.msra.mxu0 %v134
    %1036 = vmatprep.subr.mxu0 %v131
    %1037 = vmatpush2.msra.mxu0 %v130
    %1038 = vmatprep.subr.mxu0 %v127
    %1039 = vmatpush2.msra.mxu0 %v126
    %1040 = vmatprep.subr.mxu0 %v123
    %1041 = vmatpush2.msra.mxu0 %v122
    %1042 = vmatprep.subr.mxu0 %v119
    %1043 = vmatpush2.msra.mxu0 %v118
    %1044 = vmatprep.subr.mxu0 %v115
    %1045 = vmatpush2.msra.mxu0 %v114
    %1046 = vmatprep.subr.mxu0 %v111
    %1047 = vmatpush2.msra.mxu0 %v110
    %1048 = vmatprep.mubr.f32.mxu0 %v981
    %1049 = vmatmul.mubr.f32.gmra.mxu0 %v983
    %v1050 = vpop.f32.mrf.mxu0
    %v1051 = vadd.f32 0.0, %v1050
    %v1052 = vpop.f32.mrf.mxu0
    %v1053 = vadd.f32 0.0, %v1052
    %1054 = vdwg.mxu0
    %1055 = vmatprep.subr.mxu0 %v109
    %1056 = vmatpush1.msra.mxu0 %v108
    %1057 = vmatprep.subr.mxu0 %v105
    %1058 = vmatpush1.msra.mxu0 %v104
    %1059 = vmatprep.subr.mxu0 %v101
    %1060 = vmatpush1.msra.mxu0 %v100
    %1061 = vmatprep.subr.mxu0 %v97
    %1062 = vmatpush1.msra.mxu0 %v96
    %1063 = vmatprep.subr.mxu0 %v93
    %1064 = vmatpush1.msra.mxu0 %v92
    %1065 = vmatprep.subr.mxu0 %v89
    %1066 = vmatpush1.msra.mxu0 %v88
    %1067 = vmatprep.subr.mxu0 %v85
    %1068 = vmatpush1.msra.mxu0 %v84
    %1069 = vmatprep.subr.mxu0 %v81
    %1070 = vmatpush1.msra.mxu0 %v80
    %1071 = vmatprep.subr.mxu0 %v77
    %1072 = vmatpush1.msra.mxu0 %v76
    %1073 = vmatprep.subr.mxu0 %v73
    %1074 = vmatpush1.msra.mxu0 %v72
    %1075 = vmatprep.subr.mxu0 %v69
    %1076 = vmatpush1.msra.mxu0 %v68
    %1077 = vmatprep.subr.mxu0 %v65
    %1078 = vmatpush1.msra.mxu0 %v64
    %1079 = vmatprep.subr.mxu0 %v61
    %1080 = vmatpush1.msra.mxu0 %v60
    %1081 = vmatprep.subr.mxu0 %v57
    %1082 = vmatpush1.msra.mxu0 %v56
    %1083 = vmatprep.subr.mxu0 %v53
    %1084 = vmatpush1.msra.mxu0 %v52
    %1085 = vmatprep.subr.mxu0 %v49
    %1086 = vmatpush1.msra.mxu0 %v48
    %1087 = vmatprep.subr.mxu0 %v173
    %1088 = vmatpush2.msra.mxu0 %v172
    %1089 = vmatprep.subr.mxu0 %v169
    %1090 = vmatpush2.msra.mxu0 %v168
    %1091 = vmatprep.subr.mxu0 %v165
    %1092 = vmatpush2.msra.mxu0 %v164
    %1093 = vmatprep.subr.mxu0 %v161
    %1094 = vmatpush2.msra.mxu0 %v160
    %1095 = vmatprep.subr.mxu0 %v157
    %1096 = vmatpush2.msra.mxu0 %v156
    %1097 = vmatprep.subr.mxu0 %v153
    %1098 = vmatpush2.msra.mxu0 %v152
    %1099 = vmatprep.subr.mxu0 %v149
    %1100 = vmatpush2.msra.mxu0 %v148
    %1101 = vmatprep.subr.mxu0 %v145
    %1102 = vmatpush2.msra.mxu0 %v144
    %1103 = vmatprep.subr.mxu0 %v141
    %1104 = vmatpush2.msra.mxu0 %v140
    %1105 = vmatprep.subr.mxu0 %v137
    %1106 = vmatpush2.msra.mxu0 %v136
    %1107 = vmatprep.subr.mxu0 %v133
    %1108 = vmatpush2.msra.mxu0 %v132
    %1109 = vmatprep.subr.mxu0 %v129
    %1110 = vmatpush2.msra.mxu0 %v128
    %1111 = vmatprep.subr.mxu0 %v125
    %1112 = vmatpush2.msra.mxu0 %v124
    %1113 = vmatprep.subr.mxu0 %v121
    %1114 = vmatpush2.msra.mxu0 %v120
    %1115 = vmatprep.subr.mxu0 %v117
    %1116 = vmatpush2.msra.mxu0 %v116
    %1117 = vmatprep.subr.mxu0 %v113
    %1118 = vmatpush2.msra.mxu0 %v112
    %1119 = vmatprep.mubr.f32.mxu0 %v981
    %1120 = vmatmul.mubr.f32.gmra.mxu0 %v983
    %v1121 = vpop.f32.mrf.mxu0
    %v1122 = vadd.f32 0.0, %v1121
    %v1123 = vpop.f32.mrf.mxu0
    %v1124 = vadd.f32 0.0, %v1123
    %1125 = vdwg.mxu0
    %v1126 = vmul.f32 %v1051, 0.5
    %v1127 = vtanh.pop %v1126
    %v1128 = vmul.f32 %v1127, 0.5
    %v1129 = vadd.f32 %v1128, 0.5
    %v1130 = vmul.f32 %v1053, 0.5
    %v1131 = vtanh.pop %v1130
    %v1132 = vmul.f32 %v1131, 0.5
    %v1133 = vadd.f32 %v1132, 0.5
    %v1134 = vtanh.pop %v1122
    %v1135 = vmul.f32 %v1124, 0.5
    %v1136 = vtanh.pop %v1135
    %v1137 = vmul.f32 %v1136, 0.5
    %v1138 = vadd.f32 %v1137, 0.5
    %v1139 = vmul.f32 %v1133, %v979
    %v1140 = vmul.f32 %v1129, %v1134
    %v1141 = vadd.f32 %v1139, %v1140
    %v1142 = vtanh.pop %v1141
    %v1143 = vmul.f32 %v1138, %v1142
    %s1144 = scalar_lea.vmem %s0, 48
    %v1145 = vld [vmem:[%s1144] sm:$0xff]
    %1146 = vmatprep.subr.mxu0 %v107
    %1147 = vmatpush1.msra.mxu0 %v106
    %1148 = vmatprep.subr.mxu0 %v103
    %1149 = vmatpush1.msra.mxu0 %v102
    %1150 = vmatprep.subr.mxu0 %v99
    %1151 = vmatpush1.msra.mxu0 %v98
    %1152 = vmatprep.subr.mxu0 %v95
    %1153 = vmatpush1.msra.mxu0 %v94
    %1154 = vmatprep.subr.mxu0 %v91
    %1155 = vmatpush1.msra.mxu0 %v90
    %1156 = vmatprep.subr.mxu0 %v87
    %1157 = vmatpush1.msra.mxu0 %v86
    %1158 = vmatprep.subr.mxu0 %v83
    %1159 = vmatpush1.msra.mxu0 %v82
    %1160 = vmatprep.subr.mxu0 %v79
    %1161 = vmatpush1.msra.mxu0 %v78
    %1162 = vmatprep.subr.mxu0 %v75
    %1163 = vmatpush1.msra.mxu0 %v74
    %1164 = vmatprep.subr.mxu0 %v71
    %1165 = vmatpush1.msra.mxu0 %v70
    %1166 = vmatprep.subr.mxu0 %v67
    %1167 = vmatpush1.msra.mxu0 %v66
    %1168 = vmatprep.subr.mxu0 %v63
    %1169 = vmatpush1.msra.mxu0 %v62
    %1170 = vmatprep.subr.mxu0 %v59
    %1171 = vmatpush1.msra.mxu0 %v58
    %1172 = vmatprep.subr.mxu0 %v55
    %1173 = vmatpush1.msra.mxu0 %v54
    %1174 = vmatprep.subr.mxu0 %v51
    %1175 = vmatpush1.msra.mxu0 %v50
    %1176 = vmatprep.subr.mxu0 %v47
    %1177 = vmatpush1.msra.mxu0 %v46
    %1178 = vmatprep.subr.mxu0 %v171
    %1179 = vmatpush2.msra.mxu0 %v170
    %1180 = vmatprep.subr.mxu0 %v167
    %1181 = vmatpush2.msra.mxu0 %v166
    %1182 = vmatprep.subr.mxu0 %v163
    %1183 = vmatpush2.msra.mxu0 %v162
    %1184 = vmatprep.subr.mxu0 %v159
    %1185 = vmatpush2.msra.mxu0 %v158
    %1186 = vmatprep.subr.mxu0 %v155
    %1187 = vmatpush2.msra.mxu0 %v154
    %1188 = vmatprep.subr.mxu0 %v151
    %1189 = vmatpush2.msra.mxu0 %v150
    %1190 = vmatprep.subr.mxu0 %v147
    %1191 = vmatpush2.msra.mxu0 %v146
    %1192 = vmatprep.subr.mxu0 %v143
    %1193 = vmatpush2.msra.mxu0 %v142
    %1194 = vmatprep.subr.mxu0 %v139
    %1195 = vmatpush2.msra.mxu0 %v138
    %1196 = vmatprep.subr.mxu0 %v135
    %1197 = vmatpush2.msra.mxu0 %v134
    %1198 = vmatprep.subr.mxu0 %v131
    %1199 = vmatpush2.msra.mxu0 %v130
    %1200 = vmatprep.subr.mxu0 %v127
    %1201 = vmatpush2.msra.mxu0 %v126
    %1202 = vmatprep.subr.mxu0 %v123
    %1203 = vmatpush2.msra.mxu0 %v122
    %1204 = vmatprep.subr.mxu0 %v119
    %1205 = vmatpush2.msra.mxu0 %v118
    %1206 = vmatprep.subr.mxu0 %v115
    %1207 = vmatpush2.msra.mxu0 %v114
    %1208 = vmatprep.subr.mxu0 %v111
    %1209 = vmatpush2.msra.mxu0 %v110
    %1210 = vmatprep.mubr.f32.mxu0 %v1143
    %1211 = vmatmul.mubr.f32.gmra.mxu0 %v1145
    %v1212 = vpop.f32.mrf.mxu0
    %v1213 = vadd.f32 0.0, %v1212
    %v1214 = vpop.f32.mrf.mxu0
    %v1215 = vadd.f32 0.0, %v1214
    %1216 = vdwg.mxu0
    %1217 = vmatprep.subr.mxu0 %v109
    %1218 = vmatpush1.msra.mxu0 %v108
    %1219 = vmatprep.subr.mxu0 %v105
    %1220 = vmatpush1.msra.mxu0 %v104
    %1221 = vmatprep.subr.mxu0 %v101
    %1222 = vmatpush1.msra.mxu0 %v100
    %1223 = vmatprep.subr.mxu0 %v97
    %1224 = vmatpush1.msra.mxu0 %v96
    %1225 = vmatprep.subr.mxu0 %v93
    %1226 = vmatpush1.msra.mxu0 %v92
    %1227 = vmatprep.subr.mxu0 %v89
    %1228 = vmatpush1.msra.mxu0 %v88
    %1229 = vmatprep.subr.mxu0 %v85
    %1230 = vmatpush1.msra.mxu0 %v84
    %1231 = vmatprep.subr.mxu0 %v81
    %1232 = vmatpush1.msra.mxu0 %v80
    %1233 = vmatprep.subr.mxu0 %v77
    %1234 = vmatpush1.msra.mxu0 %v76
    %1235 = vmatprep.subr.mxu0 %v73
    %1236 = vmatpush1.msra.mxu0 %v72
    %1237 = vmatprep.subr.mxu0 %v69
    %1238 = vmatpush1.msra.mxu0 %v68
    %1239 = vmatprep.subr.mxu0 %v65
    %1240 = vmatpush1.msra.mxu0 %v64
    %1241 = vmatprep.subr.mxu0 %v61
    %1242 = vmatpush1.msra.mxu0 %v60
    %1243 = vmatprep.subr.mxu0 %v57
    %1244 = vmatpush1.msra.mxu0 %v56
    %1245 = vmatprep.subr.mxu0 %v53
    %1246 = vmatpush1.msra.mxu0 %v52
    %1247 = vmatprep.subr.mxu0 %v49
    %1248 = vmatpush1.msra.mxu0 %v48
    %1249 = vmatprep.subr.mxu0 %v173
    %1250 = vmatpush2.msra.mxu0 %v172
    %1251 = vmatprep.subr.mxu0 %v169
    %1252 = vmatpush2.msra.mxu0 %v168
    %1253 = vmatprep.subr.mxu0 %v165
    %1254 = vmatpush2.msra.mxu0 %v164
    %1255 = vmatprep.subr.mxu0 %v161
    %1256 = vmatpush2.msra.mxu0 %v160
    %1257 = vmatprep.subr.mxu0 %v157
    %1258 = vmatpush2.msra.mxu0 %v156
    %1259 = vmatprep.subr.mxu0 %v153
    %1260 = vmatpush2.msra.mxu0 %v152
    %1261 = vmatprep.subr.mxu0 %v149
    %1262 = vmatpush2.msra.mxu0 %v148
    %1263 = vmatprep.subr.mxu0 %v145
    %1264 = vmatpush2.msra.mxu0 %v144
    %1265 = vmatprep.subr.mxu0 %v141
    %1266 = vmatpush2.msra.mxu0 %v140
    %1267 = vmatprep.subr.mxu0 %v137
    %1268 = vmatpush2.msra.mxu0 %v136
    %1269 = vmatprep.subr.mxu0 %v133
    %1270 = vmatpush2.msra.mxu0 %v132
    %1271 = vmatprep.subr.mxu0 %v129
    %1272 = vmatpush2.msra.mxu0 %v128
    %1273 = vmatprep.subr.mxu0 %v125
    %1274 = vmatpush2.msra.mxu0 %v124
    %1275 = vmatprep.subr.mxu0 %v121
    %1276 = vmatpush2.msra.mxu0 %v120
    %1277 = vmatprep.subr.mxu0 %v117
    %1278 = vmatpush2.msra.mxu0 %v116
    %1279 = vmatprep.subr.mxu0 %v113
    %1280 = vmatpush2.msra.mxu0 %v112
    %1281 = vmatprep.mubr.f32.mxu0 %v1143
    %1282 = vmatmul.mubr.f32.gmra.mxu0 %v1145
    %v1283 = vpop.f32.mrf.mxu0
    %v1284 = vadd.f32 0.0, %v1283
    %v1285 = vpop.f32.mrf.mxu0
    %v1286 = vadd.f32 0.0, %v1285
    %1287 = vdwg.mxu0
    %v1288 = vmul.f32 %v1213, 0.5
    %v1289 = vtanh.pop %v1288
    %v1290 = vmul.f32 %v1289, 0.5
    %v1291 = vadd.f32 %v1290, 0.5
    %v1292 = vmul.f32 %v1215, 0.5
    %v1293 = vtanh.pop %v1292
    %v1294 = vmul.f32 %v1293, 0.5
    %v1295 = vadd.f32 %v1294, 0.5
    %v1296 = vtanh.pop %v1284
    %v1297 = vmul.f32 %v1286, 0.5
    %v1298 = vtanh.pop %v1297
    %v1299 = vmul.f32 %v1298, 0.5
    %v1300 = vadd.f32 %v1299, 0.5
    %v1301 = vmul.f32 %v1295, %v1141
    %v1302 = vmul.f32 %v1291, %v1296
    %v1303 = vadd.f32 %v1301, %v1302
    %v1304 = vtanh.pop %v1303
    %v1305 = vmul.f32 %v1300, %v1304
    %s1306 = scalar_lea.vmem %s0, 56
    %v1307 = vld [vmem:[%s1306] sm:$0xff]
    %1308 = vmatprep.subr.mxu0 %v107
    %1309 = vmatpush1.msra.mxu0 %v106
    %1310 = vmatprep.subr.mxu0 %v103
    %1311 = vmatpush1.msra.mxu0 %v102
    %1312 = vmatprep.subr.mxu0 %v99
    %1313 = vmatpush1.msra.mxu0 %v98
    %1314 = vmatprep.subr.mxu0 %v95
    %1315 = vmatpush1.msra.mxu0 %v94
    %1316 = vmatprep.subr.mxu0 %v91
    %1317 = vmatpush1.msra.mxu0 %v90
    %1318 = vmatprep.subr.mxu0 %v87
    %1319 = vmatpush1.msra.mxu0 %v86
    %1320 = vmatprep.subr.mxu0 %v83
    %1321 = vmatpush1.msra.mxu0 %v82
    %1322 = vmatprep.subr.mxu0 %v79
    %1323 = vmatpush1.msra.mxu0 %v78
    %1324 = vmatprep.subr.mxu0 %v75
    %1325 = vmatpush1.msra.mxu0 %v74
    %1326 = vmatprep.subr.mxu0 %v71
    %1327 = vmatpush1.msra.mxu0 %v70
    %1328 = vmatprep.subr.mxu0 %v67
    %1329 = vmatpush1.msra.mxu0 %v66
    %1330 = vmatprep.subr.mxu0 %v63
    %1331 = vmatpush1.msra.mxu0 %v62
    %1332 = vmatprep.subr.mxu0 %v59
    %1333 = vmatpush1.msra.mxu0 %v58
    %1334 = vmatprep.subr.mxu0 %v55
    %1335 = vmatpush1.msra.mxu0 %v54
    %1336 = vmatprep.subr.mxu0 %v51
    %1337 = vmatpush1.msra.mxu0 %v50
    %1338 = vmatprep.subr.mxu0 %v47
    %1339 = vmatpush1.msra.mxu0 %v46
    %1340 = vmatprep.subr.mxu0 %v171
    %1341 = vmatpush2.msra.mxu0 %v170
    %1342 = vmatprep.subr.mxu0 %v167
    %1343 = vmatpush2.msra.mxu0 %v166
    %1344 = vmatprep.subr.mxu0 %v163
    %1345 = vmatpush2.msra.mxu0 %v162
    %1346 = vmatprep.subr.mxu0 %v159
    %1347 = vmatpush2.msra.mxu0 %v158
    %1348 = vmatprep.subr.mxu0 %v155
    %1349 = vmatpush2.msra.mxu0 %v154
    %1350 = vmatprep.subr.mxu0 %v151
    %1351 = vmatpush2.msra.mxu0 %v150
    %1352 = vmatprep.subr.mxu0 %v147
    %1353 = vmatpush2.msra.mxu0 %v146
    %1354 = vmatprep.subr.mxu0 %v143
    %1355 = vmatpush2.msra.mxu0 %v142
    %1356 = vmatprep.subr.mxu0 %v139
    %1357 = vmatpush2.msra.mxu0 %v138
    %1358 = vmatprep.subr.mxu0 %v135
    %1359 = vmatpush2.msra.mxu0 %v134
    %1360 = vmatprep.subr.mxu0 %v131
    %1361 = vmatpush2.msra.mxu0 %v130
    %1362 = vmatprep.subr.mxu0 %v127
    %1363 = vmatpush2.msra.mxu0 %v126
    %1364 = vmatprep.subr.mxu0 %v123
    %1365 = vmatpush2.msra.mxu0 %v122
    %1366 = vmatprep.subr.mxu0 %v119
    %1367 = vmatpush2.msra.mxu0 %v118
    %1368 = vmatprep.subr.mxu0 %v115
    %1369 = vmatpush2.msra.mxu0 %v114
    %1370 = vmatprep.subr.mxu0 %v111
    %1371 = vmatpush2.msra.mxu0 %v110
    %1372 = vmatprep.mubr.f32.mxu0 %v1305
    %1373 = vmatmul.mubr.f32.gmra.mxu0 %v1307
    %v1374 = vpop.f32.mrf.mxu0
    %v1375 = vadd.f32 0.0, %v1374
    %v1376 = vpop.f32.mrf.mxu0
    %v1377 = vadd.f32 0.0, %v1376
    %1378 = vdwg.mxu0
    %1379 = vmatprep.subr.mxu0 %v109
    %1380 = vmatpush1.msra.mxu0 %v108
    %1381 = vmatprep.subr.mxu0 %v105
    %1382 = vmatpush1.msra.mxu0 %v104
    %1383 = vmatprep.subr.mxu0 %v101
    %1384 = vmatpush1.msra.mxu0 %v100
    %1385 = vmatprep.subr.mxu0 %v97
    %1386 = vmatpush1.msra.mxu0 %v96
    %1387 = vmatprep.subr.mxu0 %v93
    %1388 = vmatpush1.msra.mxu0 %v92
    %1389 = vmatprep.subr.mxu0 %v89
    %1390 = vmatpush1.msra.mxu0 %v88
    %1391 = vmatprep.subr.mxu0 %v85
    %1392 = vmatpush1.msra.mxu0 %v84
    %1393 = vmatprep.subr.mxu0 %v81
    %1394 = vmatpush1.msra.mxu0 %v80
    %1395 = vmatprep.subr.mxu0 %v77
    %1396 = vmatpush1.msra.mxu0 %v76
    %1397 = vmatprep.subr.mxu0 %v73
    %1398 = vmatpush1.msra.mxu0 %v72
    %1399 = vmatprep.subr.mxu0 %v69
    %1400 = vmatpush1.msra.mxu0 %v68
    %1401 = vmatprep.subr.mxu0 %v65
    %1402 = vmatpush1.msra.mxu0 %v64
    %1403 = vmatprep.subr.mxu0 %v61
    %1404 = vmatpush1.msra.mxu0 %v60
    %1405 = vmatprep.subr.mxu0 %v57
    %1406 = vmatpush1.msra.mxu0 %v56
    %1407 = vmatprep.subr.mxu0 %v53
    %1408 = vmatpush1.msra.mxu0 %v52
    %1409 = vmatprep.subr.mxu0 %v49
    %1410 = vmatpush1.msra.mxu0 %v48
    %1411 = vmatprep.subr.mxu0 %v173
    %1412 = vmatpush2.msra.mxu0 %v172
    %1413 = vmatprep.subr.mxu0 %v169
    %1414 = vmatpush2.msra.mxu0 %v168
    %1415 = vmatprep.subr.mxu0 %v165
    %1416 = vmatpush2.msra.mxu0 %v164
    %1417 = vmatprep.subr.mxu0 %v161
    %1418 = vmatpush2.msra.mxu0 %v160
    %1419 = vmatprep.subr.mxu0 %v157
    %1420 = vmatpush2.msra.mxu0 %v156
    %1421 = vmatprep.subr.mxu0 %v153
    %1422 = vmatpush2.msra.mxu0 %v152
    %1423 = vmatprep.subr.mxu0 %v149
    %1424 = vmatpush2.msra.mxu0 %v148
    %1425 = vmatprep.subr.mxu0 %v145
    %1426 = vmatpush2.msra.mxu0 %v144
    %1427 = vmatprep.subr.mxu0 %v141
    %1428 = vmatpush2.msra.mxu0 %v140
    %1429 = vmatprep.subr.mxu0 %v137
    %1430 = vmatpush2.msra.mxu0 %v136
    %1431 = vmatprep.subr.mxu0 %v133
    %1432 = vmatpush2.msra.mxu0 %v132
    %1433 = vmatprep.subr.mxu0 %v129
    %1434 = vmatpush2.msra.mxu0 %v128
    %1435 = vmatprep.subr.mxu0 %v125
    %1436 = vmatpush2.msra.mxu0 %v124
    %1437 = vmatprep.subr.mxu0 %v121
    %1438 = vmatpush2.msra.mxu0 %v120
    %1439 = vmatprep.subr.mxu0 %v117
    %1440 = vmatpush2.msra.mxu0 %v116
    %1441 = vmatprep.subr.mxu0 %v113
    %1442 = vmatpush2.msra.mxu0 %v112
    %1443 = vmatprep.mubr.f32.mxu0 %v1305
    %1444 = vmatmul.mubr.f32.gmra.mxu0 %v1307
    %v1445 = vpop.f32.mrf.mxu0
    %v1446 = vadd.f32 0.0, %v1445
    %v1447 = vpop.f32.mrf.mxu0
    %v1448 = vadd.f32 0.0, %v1447
    %1449 = vdwg.mxu0
    %v1450 = vmul.f32 %v1375, 0.5
    %v1451 = vtanh.pop %v1450
    %v1452 = vmul.f32 %v1451, 0.5
    %v1453 = vadd.f32 %v1452, 0.5
    %v1454 = vmul.f32 %v1377, 0.5
    %v1455 = vtanh.pop %v1454
    %v1456 = vmul.f32 %v1455, 0.5
    %v1457 = vadd.f32 %v1456, 0.5
    %v1458 = vtanh.pop %v1446
    %v1459 = vmul.f32 %v1448, 0.5
    %v1460 = vtanh.pop %v1459
    %v1461 = vmul.f32 %v1460, 0.5
    %v1462 = vadd.f32 %v1461, 0.5
    %v1463 = vmul.f32 %v1457, %v1303
    %v1464 = vmul.f32 %v1453, %v1458
    %v1465 = vadd.f32 %v1463, %v1464
    %v1466 = vtanh.pop %v1465
    %v1467 = vmul.f32 %v1462, %v1466
    %v1468 = vld [vmem:[#allocation4] sm:$0xff]
    %v1469 = vld [vmem:[#allocation4 + $0x8] sm:$0xff]
    %v1470 = vld [vmem:[#allocation4 + $0x10] sm:$0xff]
    %v1471 = vld [vmem:[#allocation4 + $0x18] sm:$0xff]
    %v1472 = vld [vmem:[#allocation4 + $0x20] sm:$0xff]
    %v1473 = vld [vmem:[#allocation4 + $0x28] sm:$0xff]
    %v1474 = vld [vmem:[#allocation4 + $0x30] sm:$0xff]
    %v1475 = vld [vmem:[#allocation4 + $0x38] sm:$0xff]
    %v1476 = vld [vmem:[#allocation4 + $0x40] sm:$0xff]
    %v1477 = vld [vmem:[#allocation4 + $0x48] sm:$0xff]
    %v1478 = vld [vmem:[#allocation4 + $0x50] sm:$0xff]
    %v1479 = vld [vmem:[#allocation4 + $0x58] sm:$0xff]
    %v1480 = vld [vmem:[#allocation4 + $0x60] sm:$0xff]
    %v1481 = vld [vmem:[#allocation4 + $0x68] sm:$0xff]
    %v1482 = vld [vmem:[#allocation4 + $0x70] sm:$0xff]
    %v1483 = vld [vmem:[#allocation4 + $0x78] sm:$0xff]
    %v1484 = vld [vmem:[%s3] sm:$0x1]
    %v1485 = vlaneseq
    %v1486 = vshrl.u32 %v1485, 7
    %v1487 = vsub.s32 0, %v1486
    %v1488 = vrot.slane %v1484, %v1487
    %1489 = vmatprep.subr.mxu0 0.0
    %1490 = vmatpush1.msra.mxu0 %v1483
    %1491 = vmatprep.subr.mxu0 0.0
    %1492 = vmatpush1.msra.mxu0 %v1482
    %1493 = vmatprep.subr.mxu0 0.0
    %1494 = vmatpush1.msra.mxu0 %v1481
    %1495 = vmatprep.subr.mxu0 0.0
    %1496 = vmatpush1.msra.mxu0 %v1480
    %1497 = vmatprep.subr.mxu0 0.0
    %1498 = vmatpush1.msra.mxu0 %v1479
    %1499 = vmatprep.subr.mxu0 0.0
    %1500 = vmatpush1.msra.mxu0 %v1478
    %1501 = vmatprep.subr.mxu0 0.0
    %1502 = vmatpush1.msra.mxu0 %v1477
    %1503 = vmatprep.subr.mxu0 0.0
    %1504 = vmatpush1.msra.mxu0 %v1476
    %1505 = vmatprep.subr.mxu0 0.0
    %1506 = vmatpush1.msra.mxu0 %v1475
    %1507 = vmatprep.subr.mxu0 0.0
    %1508 = vmatpush1.msra.mxu0 %v1474
    %1509 = vmatprep.subr.mxu0 0.0
    %1510 = vmatpush1.msra.mxu0 %v1473
    %1511 = vmatprep.subr.mxu0 0.0
    %1512 = vmatpush1.msra.mxu0 %v1472
    %1513 = vmatprep.subr.mxu0 0.0
    %1514 = vmatpush1.msra.mxu0 %v1471
    %1515 = vmatprep.subr.mxu0 0.0
    %1516 = vmatpush1.msra.mxu0 %v1470
    %1517 = vmatprep.subr.mxu0 0.0
    %1518 = vmatpush1.msra.mxu0 %v1469
    %1519 = vmatprep.subr.mxu0 0.0
    %1520 = vmatpush1.msra.mxu0 %v1468
    %1521 = vmatprep.subr.mxu0 0.0
    %1522 = vmatpush2.msra.mxu0 0.0
    %1523 = vmatprep.subr.mxu0 0.0
    %1524 = vmatpush2.msra.mxu0 0.0
    %1525 = vmatprep.subr.mxu0 0.0
    %1526 = vmatpush2.msra.mxu0 0.0
    %1527 = vmatprep.subr.mxu0 0.0
    %1528 = vmatpush2.msra.mxu0 0.0
    %1529 = vmatprep.subr.mxu0 0.0
    %1530 = vmatpush2.msra.mxu0 0.0
    %1531 = vmatprep.subr.mxu0 0.0
    %1532 = vmatpush2.msra.mxu0 0.0
    %1533 = vmatprep.subr.mxu0 0.0
    %1534 = vmatpush2.msra.mxu0 0.0
    %1535 = vmatprep.subr.mxu0 0.0
    %1536 = vmatpush2.msra.mxu0 0.0
    %1537 = vmatprep.subr.mxu0 0.0
    %1538 = vmatpush2.msra.mxu0 0.0
    %1539 = vmatprep.subr.mxu0 0.0
    %1540 = vmatpush2.msra.mxu0 0.0
    %1541 = vmatprep.subr.mxu0 0.0
    %1542 = vmatpush2.msra.mxu0 0.0
    %1543 = vmatprep.subr.mxu0 0.0
    %1544 = vmatpush2.msra.mxu0 0.0
    %1545 = vmatprep.subr.mxu0 0.0
    %1546 = vmatpush2.msra.mxu0 0.0
    %1547 = vmatprep.subr.mxu0 0.0
    %1548 = vmatpush2.msra.mxu0 0.0
    %1549 = vmatprep.subr.mxu0 0.0
    %1550 = vmatpush2.msra.mxu0 0.0
    %1551 = vmatprep.subr.mxu0 0.0
    %1552 = vmatpush2.msra.mxu0 0.0
    %1553 = vmatprep.mubr.f32.mxu0 0.0
    %1554 = vmatmul.mubr.f32.gmra.mxu0 %v1467
    %v1555 = vpop.f32.mrf.mxu0
    %v1556 = vadd.f32 %v1488, %v1555
    %v1557 = vpop.f32.mrf.mxu0
    %1558 = vdwg.mxu0
    %v1559 = vmax.f32 %v1556, 0.0
    %v1560 = vld [vmem:[#allocation4 + $0x80] sm:$0xff]
    %v1561 = vld [vmem:[#allocation4 + $0x88] sm:$0xff]
    %v1562 = vld [vmem:[#allocation4 + $0x90] sm:$0xff]
    %v1563 = vld [vmem:[#allocation4 + $0x98] sm:$0xff]
    %v1564 = vld [vmem:[#allocation4 + $0xa0] sm:$0xff]
    %v1565 = vld [vmem:[#allocation4 + $0xa8] sm:$0xff]
    %v1566 = vld [vmem:[#allocation4 + $0xb0] sm:$0xff]
    %v1567 = vld [vmem:[#allocation4 + $0xb8] sm:$0xff]
    %v1568 = vld [vmem:[#allocation4 + $0xc0] sm:$0xff]
    %v1569 = vld [vmem:[#allocation4 + $0xc8] sm:$0xff]
    %v1570 = vld [vmem:[#allocation4 + $0xd0] sm:$0xff]
    %v1571 = vld [vmem:[#allocation4 + $0xd8] sm:$0xff]
    %v1572 = vld [vmem:[#allocation4 + $0xe0] sm:$0xff]
    %v1573 = vld [vmem:[#allocation4 + $0xe8] sm:$0xff]
    %v1574 = vld [vmem:[#allocation4 + $0xf0] sm:$0xff]
    %v1575 = vld [vmem:[#allocation4 + $0xf8] sm:$0xff]
    %v1576 = vld [vmem:[%s3 + $0x1] sm:$0x1]
    %v1577 = vlaneseq
    %v1578 = vshrl.u32 %v1577, 7
    %v1579 = vsub.s32 0, %v1578
    %v1580 = vrot.slane %v1576, %v1579
    %1581 = vmatprep.subr.mxu0 0.0
    %1582 = vmatpush1.msra.mxu0 %v1575
    %1583 = vmatprep.subr.mxu0 0.0
    %1584 = vmatpush1.msra.mxu0 %v1574
    %1585 = vmatprep.subr.mxu0 0.0
    %1586 = vmatpush1.msra.mxu0 %v1573
    %1587 = vmatprep.subr.mxu0 0.0
    %1588 = vmatpush1.msra.mxu0 %v1572
    %1589 = vmatprep.subr.mxu0 0.0
    %1590 = vmatpush1.msra.mxu0 %v1571
    %1591 = vmatprep.subr.mxu0 0.0
    %1592 = vmatpush1.msra.mxu0 %v1570
    %1593 = vmatprep.subr.mxu0 0.0
    %1594 = vmatpush1.msra.mxu0 %v1569
    %1595 = vmatprep.subr.mxu0 0.0
    %1596 = vmatpush1.msra.mxu0 %v1568
    %1597 = vmatprep.subr.mxu0 0.0
    %1598 = vmatpush1.msra.mxu0 %v1567
    %1599 = vmatprep.subr.mxu0 0.0
    %1600 = vmatpush1.msra.mxu0 %v1566
    %1601 = vmatprep.subr.mxu0 0.0
    %1602 = vmatpush1.msra.mxu0 %v1565
    %1603 = vmatprep.subr.mxu0 0.0
    %1604 = vmatpush1.msra.mxu0 %v1564
    %1605 = vmatprep.subr.mxu0 0.0
    %1606 = vmatpush1.msra.mxu0 %v1563
    %1607 = vmatprep.subr.mxu0 0.0
    %1608 = vmatpush1.msra.mxu0 %v1562
    %1609 = vmatprep.subr.mxu0 0.0
    %1610 = vmatpush1.msra.mxu0 %v1561
    %1611 = vmatprep.subr.mxu0 0.0
    %1612 = vmatpush1.msra.mxu0 %v1560
    %1613 = vmatprep.subr.mxu0 0.0
    %1614 = vmatpush2.msra.mxu0 0.0
    %1615 = vmatprep.subr.mxu0 0.0
    %1616 = vmatpush2.msra.mxu0 0.0
    %1617 = vmatprep.subr.mxu0 0.0
    %1618 = vmatpush2.msra.mxu0 0.0
    %1619 = vmatprep.subr.mxu0 0.0
    %1620 = vmatpush2.msra.mxu0 0.0
    %1621 = vmatprep.subr.mxu0 0.0
    %1622 = vmatpush2.msra.mxu0 0.0
    %1623 = vmatprep.subr.mxu0 0.0
    %1624 = vmatpush2.msra.mxu0 0.0
    %1625 = vmatprep.subr.mxu0 0.0
    %1626 = vmatpush2.msra.mxu0 0.0
    %1627 = vmatprep.subr.mxu0 0.0
    %1628 = vmatpush2.msra.mxu0 0.0
    %1629 = vmatprep.subr.mxu0 0.0
    %1630 = vmatpush2.msra.mxu0 0.0
    %1631 = vmatprep.subr.mxu0 0.0
    %1632 = vmatpush2.msra.mxu0 0.0
    %1633 = vmatprep.subr.mxu0 0.0
    %1634 = vmatpush2.msra.mxu0 0.0
    %1635 = vmatprep.subr.mxu0 0.0
    %1636 = vmatpush2.msra.mxu0 0.0
    %1637 = vmatprep.subr.mxu0 0.0
    %1638 = vmatpush2.msra.mxu0 0.0
    %1639 = vmatprep.subr.mxu0 0.0
    %1640 = vmatpush2.msra.mxu0 0.0
    %1641 = vmatprep.subr.mxu0 0.0
    %1642 = vmatpush2.msra.mxu0 0.0
    %1643 = vmatprep.subr.mxu0 0.0
    %1644 = vmatpush2.msra.mxu0 0.0
    %1645 = vmatprep.mubr.f32.mxu0 0.0
    %1646 = vmatmul.mubr.f32.gmra.mxu0 %v1559
    %v1647 = vpop.f32.mrf.mxu0
    %v1648 = vadd.f32 %v1580, %v1647
    %v1649 = vpop.f32.mrf.mxu0
    %1650 = vdwg.mxu0
    %v1651 = vmax.f32 %v1648, 0.0
    %v1652 = vld [vmem:[#allocation4 + $0x100] sm:$0xff]
    %v1653 = vld [vmem:[#allocation4 + $0x108] sm:$0xff]
    %v1654 = vld [vmem:[#allocation4 + $0x110] sm:$0xff]
    %v1655 = vld [vmem:[#allocation4 + $0x118] sm:$0xff]
    %v1656 = vld [vmem:[#allocation4 + $0x120] sm:$0xff]
    %v1657 = vld [vmem:[#allocation4 + $0x128] sm:$0xff]
    %v1658 = vld [vmem:[#allocation4 + $0x130] sm:$0xff]
    %v1659 = vld [vmem:[#allocation4 + $0x138] sm:$0xff]
    %v1660 = vld [vmem:[#allocation4 + $0x140] sm:$0xff]
    %v1661 = vld [vmem:[#allocation4 + $0x148] sm:$0xff]
    %v1662 = vld [vmem:[#allocation4 + $0x150] sm:$0xff]
    %v1663 = vld [vmem:[#allocation4 + $0x158] sm:$0xff]
    %v1664 = vld [vmem:[#allocation4 + $0x160] sm:$0xff]
    %v1665 = vld [vmem:[#allocation4 + $0x168] sm:$0xff]
    %v1666 = vld [vmem:[#allocation4 + $0x170] sm:$0xff]
    %v1667 = vld [vmem:[#allocation4 + $0x178] sm:$0xff]
    %v1668 = vld [vmem:[%s3 + $0x2] sm:$0x1]
    %v1669 = vlaneseq
    %v1670 = vshrl.u32 %v1669, 7
    %v1671 = vsub.s32 0, %v1670
    %v1672 = vrot.slane %v1668, %v1671
    %1673 = vmatprep.subr.mxu0 0.0
    %1674 = vmatpush1.msra.mxu0 %v1667
    %1675 = vmatprep.subr.mxu0 0.0
    %1676 = vmatpush1.msra.mxu0 %v1666
    %1677 = vmatprep.subr.mxu0 0.0
    %1678 = vmatpush1.msra.mxu0 %v1665
    %1679 = vmatprep.subr.mxu0 0.0
    %1680 = vmatpush1.msra.mxu0 %v1664
    %1681 = vmatprep.subr.mxu0 0.0
    %1682 = vmatpush1.msra.mxu0 %v1663
    %1683 = vmatprep.subr.mxu0 0.0
    %1684 = vmatpush1.msra.mxu0 %v1662
    %1685 = vmatprep.subr.mxu0 0.0
    %1686 = vmatpush1.msra.mxu0 %v1661
    %1687 = vmatprep.subr.mxu0 0.0
    %1688 = vmatpush1.msra.mxu0 %v1660
    %1689 = vmatprep.subr.mxu0 0.0
    %1690 = vmatpush1.msra.mxu0 %v1659
    %1691 = vmatprep.subr.mxu0 0.0
    %1692 = vmatpush1.msra.mxu0 %v1658
    %1693 = vmatprep.subr.mxu0 0.0
    %1694 = vmatpush1.msra.mxu0 %v1657
    %1695 = vmatprep.subr.mxu0 0.0
    %1696 = vmatpush1.msra.mxu0 %v1656
    %1697 = vmatprep.subr.mxu0 0.0
    %1698 = vmatpush1.msra.mxu0 %v1655
    %1699 = vmatprep.subr.mxu0 0.0
    %1700 = vmatpush1.msra.mxu0 %v1654
    %1701 = vmatprep.subr.mxu0 0.0
    %1702 = vmatpush1.msra.mxu0 %v1653
    %1703 = vmatprep.subr.mxu0 0.0
    %1704 = vmatpush1.msra.mxu0 %v1652
    %1705 = vmatprep.subr.mxu0 0.0
    %1706 = vmatpush2.msra.mxu0 0.0
    %1707 = vmatprep.subr.mxu0 0.0
    %1708 = vmatpush2.msra.mxu0 0.0
    %1709 = vmatprep.subr.mxu0 0.0
    %1710 = vmatpush2.msra.mxu0 0.0
    %1711 = vmatprep.subr.mxu0 0.0
    %1712 = vmatpush2.msra.mxu0 0.0
    %1713 = vmatprep.subr.mxu0 0.0
    %1714 = vmatpush2.msra.mxu0 0.0
    %1715 = vmatprep.subr.mxu0 0.0
    %1716 = vmatpush2.msra.mxu0 0.0
    %1717 = vmatprep.subr.mxu0 0.0
    %1718 = vmatpush2.msra.mxu0 0.0
    %1719 = vmatprep.subr.mxu0 0.0
    %1720 = vmatpush2.msra.mxu0 0.0
    %1721 = vmatprep.subr.mxu0 0.0
    %1722 = vmatpush2.msra.mxu0 0.0
    %1723 = vmatprep.subr.mxu0 0.0
    %1724 = vmatpush2.msra.mxu0 0.0
    %1725 = vmatprep.subr.mxu0 0.0
    %1726 = vmatpush2.msra.mxu0 0.0
    %1727 = vmatprep.subr.mxu0 0.0
    %1728 = vmatpush2.msra.mxu0 0.0
    %1729 = vmatprep.subr.mxu0 0.0
    %1730 = vmatpush2.msra.mxu0 0.0
    %1731 = vmatprep.subr.mxu0 0.0
    %1732 = vmatpush2.msra.mxu0 0.0
    %1733 = vmatprep.subr.mxu0 0.0
    %1734 = vmatpush2.msra.mxu0 0.0
    %1735 = vmatprep.subr.mxu0 0.0
    %1736 = vmatpush2.msra.mxu0 0.0
    %1737 = vmatprep.mubr.f32.mxu0 0.0
    %1738 = vmatmul.mubr.f32.gmra.mxu0 %v1651
    %v1739 = vpop.f32.mrf.mxu0
    %v1740 = vadd.f32 %v1672, %v1739
    %v1741 = vpop.f32.mrf.mxu0
    %1742 = vdwg.mxu0
    %1743 = vst [vmem:[%s4] sm:$0xff] %v1740
    // Predicated region
    $region26: #{lstm_model_forward.1} parent=1 // pred_check
      _
    $region27: #{lstm_model_forward.1} parent=1 // pred_check_branch
      %1745 = sbr.rel (0) target = $region29
    $region28: #{lstm_model_forward.1} parent=1 // pred_region
      _
    $region29: #{lstm_model_forward.1} parent=1 // pred_fallthru
      _
    // Predicated region
    $region30: #{lstm_model_forward.1} parent=1 // pred_check
      _
    $region31: #{lstm_model_forward.1} parent=1 // pred_check_branch
      %1747 = sbr.rel (0) target = $region33
    $region32: #{lstm_model_forward.1} parent=1 // pred_region
      _
    $region33: #{lstm_model_forward.1} parent=1 // pred_fallthru
      _
    %1748 = vsyncpa [#allocation3], 1
    %1749 = vsyncpa [#allocation5], 1

</llo_original>
